<compile_context>
chip_gen: v7x
topology: tpu7x:2x2x1
jax: 0.10.0
libtpu: 0.0.40
codegen_flags: <defaults>
</compile_context>

<pallas_src>
import functools

import jax
import jax.numpy as jnp
from jax.experimental import pallas as pl
from jax.experimental.pallas import tpu as pltpu


def sac_actor_kernel(x_ref, w1_ref, b1_ref, w2_ref, b2_ref,
                     wm_ref, bm_ref, ws_ref, bs_ref,
                     mean_ref, log_std_ref, *, log_std_min, log_std_max):
    # x_ref: (TB, d_in) bf16 tile of the state batch.  Weights are full,
    # resident arrays (w* in bf16, biases in f32).  Outputs are two narrow
    # (TB, d_out) f32 refs (mean, clipped log_std).
    x = x_ref[...]

    # linear1 + relu (f32 accumulate, bf16 for the next MXU pass)
    h1 = jnp.dot(x, w1_ref[...], preferred_element_type=jnp.float32) + b1_ref[...]
    h1 = jnp.maximum(h1, 0.0).astype(jnp.bfloat16)

    # linear2 + relu
    h2 = jnp.dot(h1, w2_ref[...], preferred_element_type=jnp.float32) + b2_ref[...]
    h2 = jnp.maximum(h2, 0.0).astype(jnp.bfloat16)

    # mean head
    mean_ref[...] = (
        jnp.dot(h2, wm_ref[...], preferred_element_type=jnp.float32) + bm_ref[...]
    )

    # log_std head + clamp (whole tile, scalar bounds -> pure VPU min/max)
    log_std = jnp.dot(h2, ws_ref[...], preferred_element_type=jnp.float32) + bs_ref[...]
    log_std_ref[...] = jnp.clip(log_std, log_std_min, log_std_max)


def _auto_tile_b(batch):
    """Pick the batch tile.

    Per-grid-step overhead (~0.35 us) dominates the per-tile MXU + DMA work
    for hidden=256, so prefer a SINGLE grid step whenever the batch fits
    comfortably in VMEM.  Only tile genuinely large batches, using large
    (512-row) tiles so each step still amortizes the fixed cost.
    """
    max_single_step = 2048   # rows; activations + state tile stay well under VMEM
    if batch <= max_single_step:
        return batch
    for t in (2048, 1024, 512, 256, 128):
        if batch % t == 0:
            return t
    return batch  # odd batch size: single step


def _resident_spec(shape):
    # Constant-index (weight/bias) blocks: single-buffered, resident in VMEM.
    return pl.BlockSpec(shape, lambda i: (0, 0), pipeline_mode=pl.Buffered(1))


def prepare_params(params):
    """One-time weight prep (hoisted out of the forward path).

    Casts the matmul weights to bf16; biases stay f32 with shape (1, N).
    Call once at init / param update and reuse the result for every forward.
    """
    w1, b1, w2, b2, wm, bm, ws, bs = params
    return (w1.astype(jnp.bfloat16), b1,
            w2.astype(jnp.bfloat16), b2,
            wm.astype(jnp.bfloat16), bm,
            ws.astype(jnp.bfloat16), bs)


def sac_actor_forward(state, prepped_params, *, tile_b=None,
                      log_std_min=-20.0, log_std_max=2.0):
    """Runs the SacActor forward pass (mean, log_std) with a Pallas kernel.

    `prepped_params` must come from prepare_params().
    """
    w1, b1, w2, b2, wm, bm, ws, bs = prepped_params
    B, d_in = state.shape
    hidden = w1.shape[1]
    d_out = wm.shape[1]

    if tile_b is None:
        tile_b = _auto_tile_b(B)
    assert B % tile_b == 0, "batch must be divisible by the batch tile"

    x_bf = state.astype(jnp.bfloat16)
    grid = (B // tile_b,)

    kernel = functools.partial(
        sac_actor_kernel, log_std_min=log_std_min, log_std_max=log_std_max,
    )

    # Advisory cost hint so XLA can schedule this tiny custom call.
    flops = 2 * B * (d_in * hidden + hidden * hidden + 2 * hidden * d_out)
    bytes_accessed = (
        B * d_in * 2                                   # state (bf16)
        + (d_in * hidden + hidden * hidden + 2 * hidden * d_out) * 2  # weights bf16
        + (2 * hidden + 2 * d_out) * 4                 # biases f32
        + 2 * B * d_out * 4                            # mean + log_std f32
    )
    cost = pl.CostEstimate(flops=flops, transcendentals=0,
                           bytes_accessed=bytes_accessed)

    mean, log_std = pl.pallas_call(
        kernel,
        out_shape=(
            jax.ShapeDtypeStruct((B, d_out), jnp.float32),
            jax.ShapeDtypeStruct((B, d_out), jnp.float32),
        ),
        grid_spec=pltpu.PrefetchScalarGridSpec(
            num_scalar_prefetch=0,
            grid=grid,
            in_specs=[
                pl.BlockSpec((tile_b, d_in), lambda i: (i, 0)),   # state tile
                _resident_spec((d_in, hidden)),                    # w1
                _resident_spec((1, hidden)),                       # b1
                _resident_spec((hidden, hidden)),                  # w2
                _resident_spec((1, hidden)),                       # b2
                _resident_spec((hidden, d_out)),                   # mean W
                _resident_spec((1, d_out)),                        # mean b
                _resident_spec((hidden, d_out)),                   # log_std W
                _resident_spec((1, d_out)),                        # log_std b
            ],
            out_specs=[
                pl.BlockSpec((tile_b, d_out), lambda i: (i, 0)),   # mean
                pl.BlockSpec((tile_b, d_out), lambda i: (i, 0)),   # log_std
            ],
        ),
        compiler_params=pltpu.CompilerParams(
            dimension_semantics=("parallel",),
        ),
        cost_estimate=cost,
    )(x_bf, w1, b1, w2, b2, wm, bm, ws, bs)

    return mean, log_std


def init_params(key, input_size, hidden_size, output_size):
    """Deterministic synthetic params mirroring nn.Linear shapes.

    PyTorch nn.Linear stores weight as [out, in]; here we store the
    transposed [in, out] layout used by the kernel.
    """
    keys = jax.random.split(key, 8)

    def uniform_like_torch(k, shape, fan_in):
        bound = 1.0 / jnp.sqrt(fan_in)
        return jax.random.uniform(k, shape, jnp.float32, -bound, bound)

    w1 = uniform_like_torch(keys[0], (input_size, hidden_size), input_size)
    b1 = uniform_like_torch(keys[1], (1, hidden_size), input_size)
    w2 = uniform_like_torch(keys[2], (hidden_size, hidden_size), hidden_size)
    b2 = uniform_like_torch(keys[3], (1, hidden_size), hidden_size)
    wm = uniform_like_torch(keys[4], (hidden_size, output_size), hidden_size)
    bm = uniform_like_torch(keys[5], (1, output_size), hidden_size)
    ws = uniform_like_torch(keys[6], (hidden_size, output_size), hidden_size)
    bs = uniform_like_torch(keys[7], (1, output_size), hidden_size)
    return (w1, b1, w2, b2, wm, bm, ws, bs)


def reference_forward_bf16(state, params, log_std_min=-20.0, log_std_max=2.0):
    """Pure-JAX reference that mirrors the kernel's bf16/f32 numerics."""
    w1, b1, w2, b2, wm, bm, ws, bs = params
    bf = jnp.bfloat16
    x = state.astype(bf)
    h1 = jnp.dot(x, w1.astype(bf), preferred_element_type=jnp.float32) + b1
    h1 = jnp.maximum(h1, 0.0).astype(bf)
    h2 = jnp.dot(h1, w2.astype(bf), preferred_element_type=jnp.float32) + b2
    h2 = jnp.maximum(h2, 0.0).astype(bf)
    mean = jnp.dot(h2, wm.astype(bf), preferred_element_type=jnp.float32) + bm
    log_std = jnp.dot(h2, ws.astype(bf), preferred_element_type=jnp.float32) + bs
    log_std = jnp.clip(log_std, log_std_min, log_std_max)
    return mean, log_std


if __name__ == "__main__":
    # Deterministic example: batch=256 -> single grid step (per-step overhead
    # dominates at hidden=256, so one step is fastest on v5e/v6e/v7x alike).
    B, INPUT_SIZE, HIDDEN, OUTPUT_SIZE = 256, 32, 256, 8

    key = jax.random.PRNGKey(0)
    key_state, key_params = jax.random.split(key)

    state = jax.random.normal(key_state, (B, INPUT_SIZE), jnp.float32)
    params = init_params(key_params, INPUT_SIZE, HIDDEN, OUTPUT_SIZE)

    # One-time weight prep (bf16 casts) hoisted out of the forward path.
    prepped = prepare_params(params)

    mean, log_std = sac_actor_forward(state, prepped)
    jax.block_until_ready((mean, log_std))

    # Sanity-check against a pure-JAX reference with matching bf16 numerics.
    # (If bit-parity with an f32 PyTorch SacActor is required, keep f32
    # operands and precision=HIGHEST instead of the bf16 casts.)
    mean_ref, log_std_ref = reference_forward_bf16(state, params)
    assert mean.shape == (B, OUTPUT_SIZE) and log_std.shape == (B, OUTPUT_SIZE)
    assert jnp.allclose(mean, mean_ref, atol=1e-2, rtol=1e-2)
    assert jnp.allclose(log_std, log_std_ref, atol=1e-2, rtol=1e-2)
    assert bool(jnp.all(log_std <= 2.0)) and bool(jnp.all(log_std >= -20.0))

    # TODO(synk): .sample() (rsample + tanh squash + log_prob) involves RNG and
    # is part of the training loop, not forward(); not implemented in-kernel.

    print("KERNEL_OK")
</pallas_src>

<mosaic_0001>
module attributes {stable_mosaic.version = 11 : i64} {
  func.func @sac_actor_kernel(%arg0: i32, %arg1: memref<256x32xbf16, #tpu.memory_space<vmem>>, %arg2: memref<32x256xbf16, #tpu.memory_space<vmem>>, %arg3: memref<1x256xf32, #tpu.memory_space<vmem>>, %arg4: memref<256x256xbf16, #tpu.memory_space<vmem>>, %arg5: memref<1x256xf32, #tpu.memory_space<vmem>>, %arg6: memref<256x8xbf16, #tpu.memory_space<vmem>>, %arg7: memref<1x8xf32, #tpu.memory_space<vmem>>, %arg8: memref<256x8xbf16, #tpu.memory_space<vmem>>, %arg9: memref<1x8xf32, #tpu.memory_space<vmem>>, %arg10: memref<256x8xf32, #tpu.memory_space<vmem>>, %arg11: memref<256x8xf32, #tpu.memory_space<vmem>>) attributes {dimension_semantics = [#tpu.dimension_semantics<parallel>], iteration_bounds = array<i64: 1>, scalar_prefetch = 0 : i64, scratch_operands = 0 : i64, tpu.core_type = #tpu.core_type<tc>, window_params = [{transform_indices = @transform_0, window_bounds = array<i64: 256, 32>}, {pipeline_mode = #tpu.pipeline_mode<synchronous>, transform_indices = @transform_1, window_bounds = array<i64: 32, 256>}, {pipeline_mode = #tpu.pipeline_mode<synchronous>, transform_indices = @transform_2, window_bounds = array<i64: 1, 256>}, {pipeline_mode = #tpu.pipeline_mode<synchronous>, transform_indices = @transform_3, window_bounds = array<i64: 256, 256>}, {pipeline_mode = #tpu.pipeline_mode<synchronous>, transform_indices = @transform_4, window_bounds = array<i64: 1, 256>}, {pipeline_mode = #tpu.pipeline_mode<synchronous>, transform_indices = @transform_5, window_bounds = array<i64: 256, 8>}, {pipeline_mode = #tpu.pipeline_mode<synchronous>, transform_indices = @transform_6, window_bounds = array<i64: 1, 8>}, {pipeline_mode = #tpu.pipeline_mode<synchronous>, transform_indices = @transform_7, window_bounds = array<i64: 256, 8>}, {pipeline_mode = #tpu.pipeline_mode<synchronous>, transform_indices = @transform_8, window_bounds = array<i64: 1, 8>}, {transform_indices = @transform_9, window_bounds = array<i64: 256, 8>}, {transform_indices = @transform_10, window_bounds = array<i64: 256, 8>}]} {
    %c0 = arith.constant 0 : index
    %c0_0 = arith.constant 0 : index
    %0 = vector.load %arg1[%c0, %c0_0] : memref<256x32xbf16, #tpu.memory_space<vmem>>, vector<256x32xbf16>
    %c0_1 = arith.constant 0 : index
    %c0_2 = arith.constant 0 : index
    %1 = vector.load %arg2[%c0_1, %c0_2] : memref<32x256xbf16, #tpu.memory_space<vmem>>, vector<32x256xbf16>
    %cst = arith.constant dense<0.000000e+00> : vector<256x256xf32>
    %2 = tpu.matmul %0, %1, %cst {dimension_numbers = #tpu.dot_dimension_numbers<[1], [0], [0], [1], [0, 0, 1, 1], [], []>} : vector<256x32xbf16>, vector<32x256xbf16>, vector<256x256xf32> -> vector<256x256xf32>
    %c0_3 = arith.constant 0 : index
    %c0_4 = arith.constant 0 : index
    %3 = vector.load %arg3[%c0_3, %c0_4] : memref<1x256xf32, #tpu.memory_space<vmem>>, vector<1x256xf32>
    %4 = vector.broadcast %3 : vector<1x256xf32> to vector<256x256xf32>
    %5 = arith.addf %2, %4 : vector<256x256xf32>
    %cst_5 = arith.constant 0.000000e+00 : f32
    %6 = vector.broadcast %cst_5 : f32 to vector<256x256xf32>
    %7 = arith.maximumf %5, %6 : vector<256x256xf32>
    %8 = arith.truncf %7 : vector<256x256xf32> to vector<256x256xbf16>
    %c0_6 = arith.constant 0 : index
    %c0_7 = arith.constant 0 : index
    %9 = vector.load %arg4[%c0_6, %c0_7] : memref<256x256xbf16, #tpu.memory_space<vmem>>, vector<256x256xbf16>
    %cst_8 = arith.constant dense<0.000000e+00> : vector<256x256xf32>
    %10 = tpu.matmul %8, %9, %cst_8 {dimension_numbers = #tpu.dot_dimension_numbers<[1], [0], [0], [1], [0, 0, 1, 1], [], []>} : vector<256x256xbf16>, vector<256x256xbf16>, vector<256x256xf32> -> vector<256x256xf32>
    %c0_9 = arith.constant 0 : index
    %c0_10 = arith.constant 0 : index
    %11 = vector.load %arg5[%c0_9, %c0_10] : memref<1x256xf32, #tpu.memory_space<vmem>>, vector<1x256xf32>
    %12 = vector.broadcast %11 : vector<1x256xf32> to vector<256x256xf32>
    %13 = arith.addf %10, %12 : vector<256x256xf32>
    %cst_11 = arith.constant 0.000000e+00 : f32
    %14 = vector.broadcast %cst_11 : f32 to vector<256x256xf32>
    %15 = arith.maximumf %13, %14 : vector<256x256xf32>
    %16 = arith.truncf %15 : vector<256x256xf32> to vector<256x256xbf16>
    %c0_12 = arith.constant 0 : index
    %c0_13 = arith.constant 0 : index
    %17 = vector.load %arg6[%c0_12, %c0_13] : memref<256x8xbf16, #tpu.memory_space<vmem>>, vector<256x8xbf16>
    %cst_14 = arith.constant dense<0.000000e+00> : vector<256x8xf32>
    %18 = tpu.matmul %16, %17, %cst_14 {dimension_numbers = #tpu.dot_dimension_numbers<[1], [0], [0], [1], [0, 0, 1, 1], [], []>} : vector<256x256xbf16>, vector<256x8xbf16>, vector<256x8xf32> -> vector<256x8xf32>
    %c0_15 = arith.constant 0 : index
    %c0_16 = arith.constant 0 : index
    %19 = vector.load %arg7[%c0_15, %c0_16] : memref<1x8xf32, #tpu.memory_space<vmem>>, vector<1x8xf32>
    %20 = vector.broadcast %19 : vector<1x8xf32> to vector<256x8xf32>
    %21 = arith.addf %18, %20 : vector<256x8xf32>
    %c0_17 = arith.constant 0 : index
    %c0_18 = arith.constant 0 : index
    %22 = vector.load %arg10[%c0_17, %c0_18] : memref<256x8xf32, #tpu.memory_space<vmem>>, vector<256x8xf32>
    tpu.vector_store %arg10[%c0_17, %c0_18], %21 {strides = array<i32>} : memref<256x8xf32, #tpu.memory_space<vmem>>, vector<256x8xf32>,
    %c0_19 = arith.constant 0 : index
    %c0_20 = arith.constant 0 : index
    %23 = vector.load %arg8[%c0_19, %c0_20] : memref<256x8xbf16, #tpu.memory_space<vmem>>, vector<256x8xbf16>
    %cst_21 = arith.constant dense<0.000000e+00> : vector<256x8xf32>
    %24 = tpu.matmul %16, %23, %cst_21 {dimension_numbers = #tpu.dot_dimension_numbers<[1], [0], [0], [1], [0, 0, 1, 1], [], []>} : vector<256x256xbf16>, vector<256x8xbf16>, vector<256x8xf32> -> vector<256x8xf32>
    %c0_22 = arith.constant 0 : index
    %c0_23 = arith.constant 0 : index
    %25 = vector.load %arg9[%c0_22, %c0_23] : memref<1x8xf32, #tpu.memory_space<vmem>>, vector<1x8xf32>
    %26 = vector.broadcast %25 : vector<1x8xf32> to vector<256x8xf32>
    %27 = arith.addf %24, %26 : vector<256x8xf32>
    %cst_24 = arith.constant -2.000000e+01 : f32
    %cst_25 = arith.constant 2.000000e+00 : f32
    %28 = vector.broadcast %cst_24 : f32 to vector<256x8xf32>
    %29 = arith.maximumf %28, %27 : vector<256x8xf32>
    %30 = vector.broadcast %cst_25 : f32 to vector<256x8xf32>
    %31 = arith.minimumf %30, %29 : vector<256x8xf32>
    %c0_26 = arith.constant 0 : index
    %c0_27 = arith.constant 0 : index
    %32 = vector.load %arg11[%c0_26, %c0_27] : memref<256x8xf32, #tpu.memory_space<vmem>>, vector<256x8xf32>
    tpu.vector_store %arg11[%c0_26, %c0_27], %31 {strides = array<i32>} : memref<256x8xf32, #tpu.memory_space<vmem>>, vector<256x8xf32>,
    return
  }
  func.func @transform_0(%arg0: i32) -> (i32, i32) {
    %c0_i32 = arith.constant 0 : i32
    %c0_i32_0 = arith.constant 0 : i32
    return %arg0, %c0_i32 : i32, i32
  }
  func.func @transform_1(%arg0: i32) -> (i32, i32) {
    %c0_i32 = arith.constant 0 : i32
    %c0_i32_0 = arith.constant 0 : i32
    %c0_i32_1 = arith.constant 0 : i32
    return %c0_i32, %c0_i32_0 : i32, i32
  }
  func.func @transform_2(%arg0: i32) -> (i32, i32) {
    %c0_i32 = arith.constant 0 : i32
    %c0_i32_0 = arith.constant 0 : i32
    %c0_i32_1 = arith.constant 0 : i32
    return %c0_i32, %c0_i32_0 : i32, i32
  }
  func.func @transform_3(%arg0: i32) -> (i32, i32) {
    %c0_i32 = arith.constant 0 : i32
    %c0_i32_0 = arith.constant 0 : i32
    %c0_i32_1 = arith.constant 0 : i32
    return %c0_i32, %c0_i32_0 : i32, i32
  }
  func.func @transform_4(%arg0: i32) -> (i32, i32) {
    %c0_i32 = arith.constant 0 : i32
    %c0_i32_0 = arith.constant 0 : i32
    %c0_i32_1 = arith.constant 0 : i32
    return %c0_i32, %c0_i32_0 : i32, i32
  }
  func.func @transform_5(%arg0: i32) -> (i32, i32) {
    %c0_i32 = arith.constant 0 : i32
    %c0_i32_0 = arith.constant 0 : i32
    %c0_i32_1 = arith.constant 0 : i32
    return %c0_i32, %c0_i32_0 : i32, i32
  }
  func.func @transform_6(%arg0: i32) -> (i32, i32) {
    %c0_i32 = arith.constant 0 : i32
    %c0_i32_0 = arith.constant 0 : i32
    %c0_i32_1 = arith.constant 0 : i32
    return %c0_i32, %c0_i32_0 : i32, i32
  }
  func.func @transform_7(%arg0: i32) -> (i32, i32) {
    %c0_i32 = arith.constant 0 : i32
    %c0_i32_0 = arith.constant 0 : i32
    %c0_i32_1 = arith.constant 0 : i32
    return %c0_i32, %c0_i32_0 : i32, i32
  }
  func.func @transform_8(%arg0: i32) -> (i32, i32) {
    %c0_i32 = arith.constant 0 : i32
    %c0_i32_0 = arith.constant 0 : i32
    %c0_i32_1 = arith.constant 0 : i32
    return %c0_i32, %c0_i32_0 : i32, i32
  }
  func.func @transform_9(%arg0: i32) -> (i32, i32) {
    %c0_i32 = arith.constant 0 : i32
    %c0_i32_0 = arith.constant 0 : i32
    return %arg0, %c0_i32 : i32, i32
  }
  func.func @transform_10(%arg0: i32) -> (i32, i32) {
    %c0_i32 = arith.constant 0 : i32
    %c0_i32_0 = arith.constant 0 : i32
    return %arg0, %c0_i32 : i32, i32
  }
}

</mosaic_0001>

<llo_original>
// kernel: tpu_custom_call.1
$region0: #{tpu_custom_call.1}
  #allocation0 [shape = 'u32[]', space=smem, size = 0x4, offset = 0x4, fixed_abs, tag = 'smem constant byte address 0x4 - core index']
  #allocation1 [shape = 'u32[144,128]{1,0:T(1,128)}', space=vmem, size = 0x12000, scoped, tag = 'internal scratch']
  %s0 = inlined_call_operand.vmem [shape: bf16[256,32], index: 0, kind: input, shape index: {}]
  %s1 = inlined_call_operand.vmem [shape: bf16[32,256], index: 1, kind: input, shape index: {}]
  %s2 = inlined_call_operand.vmem [shape: f32[1,256], index: 2, kind: input, shape index: {}]
  %s3 = inlined_call_operand.vmem [shape: bf16[256,256], index: 3, kind: input, shape index: {}]
  %s4 = inlined_call_operand.vmem [shape: f32[1,256], index: 4, kind: input, shape index: {}]
  %s5 = inlined_call_operand.vmem [shape: bf16[256,8], index: 5, kind: input, shape index: {}]
  %s6 = inlined_call_operand.vmem [shape: f32[1,8], index: 6, kind: input, shape index: {}]
  %s7 = inlined_call_operand.vmem [shape: bf16[256,8], index: 7, kind: input, shape index: {}]
  %s8 = inlined_call_operand.vmem [shape: f32[1,8], index: 8, kind: input, shape index: {}]
  %s9 = inlined_call_operand.vmem [shape: f32[256,8], index: 9, kind: output, shape index: {0}]
  %s10 = inlined_call_operand.vmem [shape: f32[256,8], index: 10, kind: output, shape index: {1}]
  %11 = xla_tuple %s9, %s10
  %s12 = sld [smem:[#allocation0]]
  $region54: #{tpu_custom_call.1} parent=0
    _
  %s14 = ssub.s32 1, %s12
  %s15 = scalar_select 0, %s14, %s12
  // Predicated region
  $region2: #{tpu_custom_call.1} parent=0 // pred_check
    _
  $region3: #{tpu_custom_call.1} parent=0 // pred_check_branch
    %17 = sbr.rel (0) target = $region5
  $region4: #{tpu_custom_call.1} parent=0 // pred_region
    _
  $region5: #{tpu_custom_call.1} parent=0 // pred_fallthru
    _
  // Predicated region
  $region6: #{tpu_custom_call.1} parent=0 // pred_check
    _
  $region7: #{tpu_custom_call.1} parent=0 // pred_check_branch
    %19 = sbr.rel (0) target = $region9
  $region8: #{tpu_custom_call.1} parent=0 // pred_region
    _
  $region9: #{tpu_custom_call.1} parent=0 // pred_fallthru
    _
  // Predicated region
  $region10: #{tpu_custom_call.1} parent=0 // pred_check
    _
  $region11: #{tpu_custom_call.1} parent=0 // pred_check_branch
    %21 = sbr.rel (0) target = $region13
  $region12: #{tpu_custom_call.1} parent=0 // pred_region
    _
  $region13: #{tpu_custom_call.1} parent=0 // pred_fallthru
    _
  // Predicated region
  $region14: #{tpu_custom_call.1} parent=0 // pred_check
    _
  $region15: #{tpu_custom_call.1} parent=0 // pred_check_branch
    %23 = sbr.rel (0) target = $region17
  $region16: #{tpu_custom_call.1} parent=0 // pred_region
    _
  $region17: #{tpu_custom_call.1} parent=0 // pred_fallthru
    _
  // Predicated region
  $region18: #{tpu_custom_call.1} parent=0 // pred_check
    _
  $region19: #{tpu_custom_call.1} parent=0 // pred_check_branch
    %25 = sbr.rel (0) target = $region21
  $region20: #{tpu_custom_call.1} parent=0 // pred_region
    _
  $region21: #{tpu_custom_call.1} parent=0 // pred_fallthru
    _
  // Predicated region
  $region22: #{tpu_custom_call.1} parent=0 // pred_check
    _
  $region23: #{tpu_custom_call.1} parent=0 // pred_check_branch
    %27 = sbr.rel (0) target = $region25
  $region24: #{tpu_custom_call.1} parent=0 // pred_region
    _
  $region25: #{tpu_custom_call.1} parent=0 // pred_fallthru
    _
  // Predicated region
  $region26: #{tpu_custom_call.1} parent=0 // pred_check
    _
  $region27: #{tpu_custom_call.1} parent=0 // pred_check_branch
    %29 = sbr.rel (0) target = $region29
  $region28: #{tpu_custom_call.1} parent=0 // pred_region
    _
  $region29: #{tpu_custom_call.1} parent=0 // pred_fallthru
    _
  // Predicated region
  $region30: #{tpu_custom_call.1} parent=0 // pred_check
    _
  $region31: #{tpu_custom_call.1} parent=0 // pred_check_branch
    %31 = sbr.rel (0) target = $region33
  $region32: #{tpu_custom_call.1} parent=0 // pred_region
    _
  $region33: #{tpu_custom_call.1} parent=0 // pred_fallthru
    _
  // Predicated region
  $region34: #{tpu_custom_call.1} parent=0 // pred_check
    _
  $region35: #{tpu_custom_call.1} parent=0 // pred_check_branch
    %33 = sbr.rel (0) target = $region37
  $region36: #{tpu_custom_call.1} parent=0 // pred_region
    _
  $region37: #{tpu_custom_call.1} parent=0 // pred_fallthru
    _
  %v35 = vld [vmem:[%s0] sm:$0xf]
  %v36 = vld [vmem:[%s0 + $0x4] sm:$0xf]
  %v37 = vld [vmem:[%s0 + $0x8] sm:$0xf]
  %v38 = vld [vmem:[%s0 + $0xc] sm:$0xf]
  %v39 = vld [vmem:[%s0 + $0x10] sm:$0xf]
  %v40 = vld [vmem:[%s0 + $0x14] sm:$0xf]
  %v41 = vld [vmem:[%s0 + $0x18] sm:$0xf]
  %v42 = vld [vmem:[%s0 + $0x1c] sm:$0xf]
  %v43 = vld [vmem:[%s0 + $0x20] sm:$0xf]
  %v44 = vld [vmem:[%s0 + $0x24] sm:$0xf]
  %v45 = vld [vmem:[%s0 + $0x28] sm:$0xf]
  %v46 = vld [vmem:[%s0 + $0x2c] sm:$0xf]
  %v47 = vld [vmem:[%s0 + $0x30] sm:$0xf]
  %v48 = vld [vmem:[%s0 + $0x34] sm:$0xf]
  %v49 = vld [vmem:[%s0 + $0x38] sm:$0xf]
  %v50 = vld [vmem:[%s0 + $0x3c] sm:$0xf]
  %v51 = vld [vmem:[%s0 + $0x40] sm:$0xf]
  %v52 = vld [vmem:[%s0 + $0x44] sm:$0xf]
  %v53 = vld [vmem:[%s0 + $0x48] sm:$0xf]
  %v54 = vld [vmem:[%s0 + $0x4c] sm:$0xf]
  %v55 = vld [vmem:[%s0 + $0x50] sm:$0xf]
  %v56 = vld [vmem:[%s0 + $0x54] sm:$0xf]
  %v57 = vld [vmem:[%s0 + $0x58] sm:$0xf]
  %v58 = vld [vmem:[%s0 + $0x5c] sm:$0xf]
  %v59 = vld [vmem:[%s0 + $0x60] sm:$0xf]
  %v60 = vld [vmem:[%s0 + $0x64] sm:$0xf]
  %v61 = vld [vmem:[%s0 + $0x68] sm:$0xf]
  %v62 = vld [vmem:[%s0 + $0x6c] sm:$0xf]
  %v63 = vld [vmem:[%s0 + $0x70] sm:$0xf]
  %v64 = vld [vmem:[%s0 + $0x74] sm:$0xf]
  %v65 = vld [vmem:[%s0 + $0x78] sm:$0xf]
  %v66 = vld [vmem:[%s0 + $0x7c] sm:$0xf]
  %v67 = vld [vmem:[%s1] sm:$0xff]
  %v68 = vld [vmem:[%s1 + $0x8] sm:$0xff]
  %v69 = vld [vmem:[%s1 + $0x10] sm:$0xff]
  %v70 = vld [vmem:[%s1 + $0x18] sm:$0xff]
  %v71 = vld [vmem:[%s2] sm:$0x3]
  %v73 = vlaneseq
  %v74 = vshrl.u32 %v73, 7
  %v75 = vsub.s32 0, %v74
  %v76 = vrot.slane %v71, %v75
  %v77 = vlaneseq
  %v78 = vshrl.u32 %v77, 7
  %v79 = vsub.s32 1, %v78
  %v80 = vrot.slane %v71, %v79
  %v115 = vunpack.c.l.b16 %v35
  %v116 = vunpack.c.l.b16 %v36
  %v117 = vunpack.c.l.b16 %v37
  %v118 = vunpack.c.l.b16 %v38
  %v119 = vunpack.c.l.b16 %v39
  %v120 = vunpack.c.l.b16 %v40
  %v121 = vunpack.c.l.b16 %v41
  %v122 = vunpack.c.l.b16 %v42
  %v123 = vunpack.c.l.b16 %v43
  %v124 = vunpack.c.l.b16 %v44
  %v125 = vunpack.c.l.b16 %v45
  %v126 = vunpack.c.l.b16 %v46
  %v127 = vunpack.c.l.b16 %v47
  %v128 = vunpack.c.l.b16 %v48
  %v129 = vunpack.c.l.b16 %v49
  %v130 = vunpack.c.l.b16 %v50
  %v131 = vunpack.c.l.b16 %v51
  %v132 = vunpack.c.l.b16 %v52
  %v133 = vunpack.c.l.b16 %v53
  %v134 = vunpack.c.l.b16 %v54
  %v135 = vunpack.c.l.b16 %v55
  %v136 = vunpack.c.l.b16 %v56
  %v137 = vunpack.c.l.b16 %v57
  %v138 = vunpack.c.l.b16 %v58
  %v139 = vunpack.c.l.b16 %v59
  %v140 = vunpack.c.l.b16 %v60
  %v141 = vunpack.c.l.b16 %v61
  %v142 = vunpack.c.l.b16 %v62
  %v143 = vunpack.c.l.b16 %v63
  %v144 = vunpack.c.l.b16 %v64
  %v145 = vunpack.c.l.b16 %v65
  %v146 = vunpack.c.l.b16 %v66
  %v147 = vpack.c.b16 %v116, %v115
  %v148 = vpack.c.b16 %v118, %v117
  %v149 = vpack.c.b16 %v120, %v119
  %v150 = vpack.c.b16 %v122, %v121
  %v151 = vpack.c.b16 %v124, %v123
  %v152 = vpack.c.b16 %v126, %v125
  %v153 = vpack.c.b16 %v128, %v127
  %v154 = vpack.c.b16 %v130, %v129
  %v155 = vpack.c.b16 %v132, %v131
  %v156 = vpack.c.b16 %v134, %v133
  %v157 = vpack.c.b16 %v136, %v135
  %v158 = vpack.c.b16 %v138, %v137
  %v159 = vpack.c.b16 %v140, %v139
  %v160 = vpack.c.b16 %v142, %v141
  %v161 = vpack.c.b16 %v144, %v143
  %v162 = vpack.c.b16 %v146, %v145
  %v167 = vunpack.c.l.b16 %v67
  %v168 = vunpack.c.h.b16 %v67
  %v169 = vunpack.c.l.b16 %v68
  %v170 = vunpack.c.h.b16 %v68
  %v171 = vunpack.c.l.b16 %v69
  %v172 = vunpack.c.h.b16 %v69
  %v173 = vunpack.c.l.b16 %v70
  %v174 = vunpack.c.h.b16 %v70
  %v175 = vpack.c.b16 %v169, %v167
  %v176 = vpack.c.b16 %v170, %v168
  %v177 = vpack.c.b16 %v173, %v171
  %v178 = vpack.c.b16 %v174, %v172
  %vm183 = vcmask 261120
  %v185 = vsel %vm183, %v147, 0
  %v188 = vsel %vm183, %v148, 0
  %v191 = vsel %vm183, %v149, 0
  %v194 = vsel %vm183, %v150, 0
  %v197 = vsel %vm183, %v151, 0
  %v200 = vsel %vm183, %v152, 0
  %v203 = vsel %vm183, %v153, 0
  %v206 = vsel %vm183, %v154, 0
  %v209 = vsel %vm183, %v155, 0
  %v212 = vsel %vm183, %v156, 0
  %v215 = vsel %vm183, %v157, 0
  %v218 = vsel %vm183, %v158, 0
  %v221 = vsel %vm183, %v159, 0
  %v224 = vsel %vm183, %v160, 0
  %v227 = vsel %vm183, %v161, 0
  %v230 = vsel %vm183, %v162, 0
  %232 = vmatprep.subr.bf16.mxu0 %v176
  %233 = vmatpush1.bf16.msra.mxu0 %v175
  %234 = vmatprep.subr.bf16.mxu0 %v178
  %235 = vmatpush1.bf16.msra.mxu0 %v177
  %236 = vmatprep.subr.bf16.mxu0 0
  %237 = vmatpush1.bf16.msra.mxu0 0
  %238 = vmatprep.subr.bf16.mxu0 0
  %239 = vmatpush1.bf16.msra.mxu0 0
  %240 = vmatprep.subr.bf16.mxu0 0
  %241 = vmatpush1.bf16.msra.mxu0 0
  %242 = vmatprep.subr.bf16.mxu0 0
  %243 = vmatpush1.bf16.msra.mxu0 0
  %244 = vmatprep.subr.bf16.mxu0 0
  %245 = vmatpush1.bf16.msra.mxu0 0
  %246 = vmatprep.subr.bf16.mxu0 0
  %247 = vmatpush1.bf16.msra.mxu0 0
  %248 = vmatprep.subr.bf16.mxu0 0
  %249 = vmatpush1.bf16.msra.mxu0 0
  %250 = vmatprep.subr.bf16.mxu0 0
  %251 = vmatpush1.bf16.msra.mxu0 0
  %252 = vmatprep.subr.bf16.mxu0 0
  %253 = vmatpush1.bf16.msra.mxu0 0
  %254 = vmatprep.subr.bf16.mxu0 0
  %255 = vmatpush1.bf16.msra.mxu0 0
  %256 = vmatprep.subr.bf16.mxu0 0
  %257 = vmatpush1.bf16.msra.mxu0 0
  %258 = vmatprep.subr.bf16.mxu0 0
  %259 = vmatpush1.bf16.msra.mxu0 0
  %260 = vmatprep.subr.bf16.mxu0 0
  %261 = vmatpush1.bf16.msra.mxu0 0
  %262 = vmatprep.subr.bf16.mxu0 0
  %263 = vmatpush1.bf16.msra.mxu0 0
  %264 = vmatprep.mubr.bf16.mxu0 0
  %265 = vmatmul.mubr.bf16.gmra.mrb[0].mxu0 %v185
  %v266 = vpop.f32.mrb[0].mxu0
  %v267 = vadd.f32 %v76, %v266
  %v268 = vpop.f32.mrb[0].mxu0
  %v269 = vadd.f32 %v80, %v268
  %v270 = vpop.f32.mrb[0].mxu0
  %v271 = vadd.f32 %v76, %v270
  %v272 = vpop.f32.mrb[0].mxu0
  %v273 = vadd.f32 %v80, %v272
  %274 = vmatprep.mubr.bf16.mxu0 0
  %275 = vmatmul.mubr.bf16.gmra.mrb[0].mxu0 %v188
  %v276 = vpop.f32.mrb[0].mxu0
  %v277 = vadd.f32 %v76, %v276
  %v278 = vpop.f32.mrb[0].mxu0
  %v279 = vadd.f32 %v80, %v278
  %v280 = vpop.f32.mrb[0].mxu0
  %v281 = vadd.f32 %v76, %v280
  %v282 = vpop.f32.mrb[0].mxu0
  %v283 = vadd.f32 %v80, %v282
  %284 = vmatprep.mubr.bf16.mxu0 0
  %285 = vmatmul.mubr.bf16.gmra.mrb[0].mxu0 %v191
  %v286 = vpop.f32.mrb[0].mxu0
  %v287 = vadd.f32 %v76, %v286
  %v288 = vpop.f32.mrb[0].mxu0
  %v289 = vadd.f32 %v80, %v288
  %v290 = vpop.f32.mrb[0].mxu0
  %v291 = vadd.f32 %v76, %v290
  %v292 = vpop.f32.mrb[0].mxu0
  %v293 = vadd.f32 %v80, %v292
  %294 = vmatprep.mubr.bf16.mxu0 0
  %295 = vmatmul.mubr.bf16.gmra.mrb[0].mxu0 %v194
  %v296 = vpop.f32.mrb[0].mxu0
  %v297 = vadd.f32 %v76, %v296
  %v298 = vpop.f32.mrb[0].mxu0
  %v299 = vadd.f32 %v80, %v298
  %v300 = vpop.f32.mrb[0].mxu0
  %v301 = vadd.f32 %v76, %v300
  %v302 = vpop.f32.mrb[0].mxu0
  %v303 = vadd.f32 %v80, %v302
  %304 = vmatprep.mubr.bf16.mxu0 0
  %305 = vmatmul.mubr.bf16.gmra.mrb[0].mxu0 %v197
  %v306 = vpop.f32.mrb[0].mxu0
  %v307 = vadd.f32 %v76, %v306
  %v308 = vpop.f32.mrb[0].mxu0
  %v309 = vadd.f32 %v80, %v308
  %v310 = vpop.f32.mrb[0].mxu0
  %v311 = vadd.f32 %v76, %v310
  %v312 = vpop.f32.mrb[0].mxu0
  %v313 = vadd.f32 %v80, %v312
  %314 = vmatprep.mubr.bf16.mxu0 0
  %315 = vmatmul.mubr.bf16.gmra.mrb[0].mxu0 %v200
  %v316 = vpop.f32.mrb[0].mxu0
  %v317 = vadd.f32 %v76, %v316
  %v318 = vpop.f32.mrb[0].mxu0
  %v319 = vadd.f32 %v80, %v318
  %v320 = vpop.f32.mrb[0].mxu0
  %v321 = vadd.f32 %v76, %v320
  %v322 = vpop.f32.mrb[0].mxu0
  %v323 = vadd.f32 %v80, %v322
  %324 = vmatprep.mubr.bf16.mxu0 0
  %325 = vmatmul.mubr.bf16.gmra.mrb[0].mxu0 %v203
  %v326 = vpop.f32.mrb[0].mxu0
  %v327 = vadd.f32 %v76, %v326
  %v328 = vpop.f32.mrb[0].mxu0
  %v329 = vadd.f32 %v80, %v328
  %v330 = vpop.f32.mrb[0].mxu0
  %v331 = vadd.f32 %v76, %v330
  %v332 = vpop.f32.mrb[0].mxu0
  %v333 = vadd.f32 %v80, %v332
  %334 = vmatprep.mubr.bf16.mxu0 0
  %335 = vmatmul.mubr.bf16.gmra.mrb[0].mxu0 %v206
  %v336 = vpop.f32.mrb[0].mxu0
  %v337 = vadd.f32 %v76, %v336
  %v338 = vpop.f32.mrb[0].mxu0
  %v339 = vadd.f32 %v80, %v338
  %v340 = vpop.f32.mrb[0].mxu0
  %v341 = vadd.f32 %v76, %v340
  %v342 = vpop.f32.mrb[0].mxu0
  %v343 = vadd.f32 %v80, %v342
  %344 = vmatprep.mubr.bf16.mxu0 0
  %345 = vmatmul.mubr.bf16.gmra.mrb[0].mxu0 %v209
  %v346 = vpop.f32.mrb[0].mxu0
  %v347 = vadd.f32 %v76, %v346
  %v348 = vpop.f32.mrb[0].mxu0
  %v349 = vadd.f32 %v80, %v348
  %v350 = vpop.f32.mrb[0].mxu0
  %v351 = vadd.f32 %v76, %v350
  %v352 = vpop.f32.mrb[0].mxu0
  %v353 = vadd.f32 %v80, %v352
  %354 = vmatprep.mubr.bf16.mxu0 0
  %355 = vmatmul.mubr.bf16.gmra.mrb[0].mxu0 %v212
  %v356 = vpop.f32.mrb[0].mxu0
  %v357 = vadd.f32 %v76, %v356
  %v358 = vpop.f32.mrb[0].mxu0
  %v359 = vadd.f32 %v80, %v358
  %v360 = vpop.f32.mrb[0].mxu0
  %v361 = vadd.f32 %v76, %v360
  %v362 = vpop.f32.mrb[0].mxu0
  %v363 = vadd.f32 %v80, %v362
  %364 = vmatprep.mubr.bf16.mxu0 0
  %365 = vmatmul.mubr.bf16.gmra.mrb[0].mxu0 %v215
  %v366 = vpop.f32.mrb[0].mxu0
  %v367 = vadd.f32 %v76, %v366
  %v368 = vpop.f32.mrb[0].mxu0
  %v369 = vadd.f32 %v80, %v368
  %v370 = vpop.f32.mrb[0].mxu0
  %v371 = vadd.f32 %v76, %v370
  %v372 = vpop.f32.mrb[0].mxu0
  %v373 = vadd.f32 %v80, %v372
  %374 = vmatprep.mubr.bf16.mxu0 0
  %375 = vmatmul.mubr.bf16.gmra.mrb[0].mxu0 %v218
  %v376 = vpop.f32.mrb[0].mxu0
  %v377 = vadd.f32 %v76, %v376
  %v378 = vpop.f32.mrb[0].mxu0
  %v379 = vadd.f32 %v80, %v378
  %v380 = vpop.f32.mrb[0].mxu0
  %v381 = vadd.f32 %v76, %v380
  %v382 = vpop.f32.mrb[0].mxu0
  %v383 = vadd.f32 %v80, %v382
  %384 = vmatprep.mubr.bf16.mxu0 0
  %385 = vmatmul.mubr.bf16.gmra.mrb[0].mxu0 %v221
  %v386 = vpop.f32.mrb[0].mxu0
  %v387 = vadd.f32 %v76, %v386
  %v388 = vpop.f32.mrb[0].mxu0
  %v389 = vadd.f32 %v80, %v388
  %v390 = vpop.f32.mrb[0].mxu0
  %v391 = vadd.f32 %v76, %v390
  %v392 = vpop.f32.mrb[0].mxu0
  %v393 = vadd.f32 %v80, %v392
  %394 = vmatprep.mubr.bf16.mxu0 0
  %395 = vmatmul.mubr.bf16.gmra.mrb[0].mxu0 %v224
  %v396 = vpop.f32.mrb[0].mxu0
  %v397 = vadd.f32 %v76, %v396
  %v398 = vpop.f32.mrb[0].mxu0
  %v399 = vadd.f32 %v80, %v398
  %v400 = vpop.f32.mrb[0].mxu0
  %v401 = vadd.f32 %v76, %v400
  %v402 = vpop.f32.mrb[0].mxu0
  %v403 = vadd.f32 %v80, %v402
  %404 = vmatprep.mubr.bf16.mxu0 0
  %405 = vmatmul.mubr.bf16.gmra.mrb[0].mxu0 %v227
  %v406 = vpop.f32.mrb[0].mxu0
  %v407 = vadd.f32 %v76, %v406
  %v408 = vpop.f32.mrb[0].mxu0
  %v409 = vadd.f32 %v80, %v408
  %v410 = vpop.f32.mrb[0].mxu0
  %v411 = vadd.f32 %v76, %v410
  %v412 = vpop.f32.mrb[0].mxu0
  %v413 = vadd.f32 %v80, %v412
  %414 = vmatprep.mubr.bf16.mxu0 0
  %415 = vmatmul.mubr.bf16.gmra.mrb[0].mxu0 %v230
  %v416 = vpop.f32.mrb[0].mxu0
  %v417 = vadd.f32 %v76, %v416
  %v418 = vpop.f32.mrb[0].mxu0
  %v419 = vadd.f32 %v80, %v418
  %v420 = vpop.f32.mrb[0].mxu0
  %v421 = vadd.f32 %v76, %v420
  %v422 = vpop.f32.mrb[0].mxu0
  %v423 = vadd.f32 %v80, %v422
  %424 = vdwg.mxu0
  %v425 = vmax.f32 %v267, 0.0
  %v426 = vmax.f32 %v269, 0.0
  %v427 = vmax.f32 %v271, 0.0
  %v428 = vmax.f32 %v273, 0.0
  %v429 = vmax.f32 %v277, 0.0
  %v430 = vmax.f32 %v279, 0.0
  %v431 = vmax.f32 %v281, 0.0
  %v432 = vmax.f32 %v283, 0.0
  %v433 = vmax.f32 %v287, 0.0
  %v434 = vmax.f32 %v289, 0.0
  %v435 = vmax.f32 %v291, 0.0
  %v436 = vmax.f32 %v293, 0.0
  %v437 = vmax.f32 %v297, 0.0
  %v438 = vmax.f32 %v299, 0.0
  %v439 = vmax.f32 %v301, 0.0
  %v440 = vmax.f32 %v303, 0.0
  %v441 = vmax.f32 %v307, 0.0
  %v442 = vmax.f32 %v309, 0.0
  %v443 = vmax.f32 %v311, 0.0
  %v444 = vmax.f32 %v313, 0.0
  %v445 = vmax.f32 %v317, 0.0
  %v446 = vmax.f32 %v319, 0.0
  %v447 = vmax.f32 %v321, 0.0
  %v448 = vmax.f32 %v323, 0.0
  %v449 = vmax.f32 %v327, 0.0
  %v450 = vmax.f32 %v329, 0.0
  %v451 = vmax.f32 %v331, 0.0
  %v452 = vmax.f32 %v333, 0.0
  %v453 = vmax.f32 %v337, 0.0
  %v454 = vmax.f32 %v339, 0.0
  %v455 = vmax.f32 %v341, 0.0
  %v456 = vmax.f32 %v343, 0.0
  %v457 = vmax.f32 %v347, 0.0
  %v458 = vmax.f32 %v349, 0.0
  %v459 = vmax.f32 %v351, 0.0
  %v460 = vmax.f32 %v353, 0.0
  %v461 = vmax.f32 %v357, 0.0
  %v462 = vmax.f32 %v359, 0.0
  %v463 = vmax.f32 %v361, 0.0
  %v464 = vmax.f32 %v363, 0.0
  %v465 = vmax.f32 %v367, 0.0
  %v466 = vmax.f32 %v369, 0.0
  %v467 = vmax.f32 %v371, 0.0
  %v468 = vmax.f32 %v373, 0.0
  %v469 = vmax.f32 %v377, 0.0
  %v470 = vmax.f32 %v379, 0.0
  %v471 = vmax.f32 %v381, 0.0
  %v472 = vmax.f32 %v383, 0.0
  %v473 = vmax.f32 %v387, 0.0
  %v474 = vmax.f32 %v389, 0.0
  %v475 = vmax.f32 %v391, 0.0
  %v476 = vmax.f32 %v393, 0.0
  %v477 = vmax.f32 %v397, 0.0
  %v478 = vmax.f32 %v399, 0.0
  %v479 = vmax.f32 %v401, 0.0
  %v480 = vmax.f32 %v403, 0.0
  %v481 = vmax.f32 %v407, 0.0
  %v482 = vmax.f32 %v409, 0.0
  %v483 = vmax.f32 %v411, 0.0
  %v484 = vmax.f32 %v413, 0.0
  %v485 = vmax.f32 %v417, 0.0
  %v486 = vmax.f32 %v419, 0.0
  %v487 = vmax.f32 %v421, 0.0
  %v488 = vmax.f32 %v423, 0.0
  %v489 = vpack.c.bf16 %v427, %v425
  %v490 = vpack.c.bf16 %v428, %v426
  %v491 = vpack.c.bf16 %v431, %v429
  %v492 = vpack.c.bf16 %v432, %v430
  %v493 = vpack.c.bf16 %v435, %v433
  %v494 = vpack.c.bf16 %v436, %v434
  %v495 = vpack.c.bf16 %v439, %v437
  %v496 = vpack.c.bf16 %v440, %v438
  %v497 = vpack.c.bf16 %v443, %v441
  %v498 = vpack.c.bf16 %v444, %v442
  %v499 = vpack.c.bf16 %v447, %v445
  %v500 = vpack.c.bf16 %v448, %v446
  %v501 = vpack.c.bf16 %v451, %v449
  %v502 = vpack.c.bf16 %v452, %v450
  %v503 = vpack.c.bf16 %v455, %v453
  %v504 = vpack.c.bf16 %v456, %v454
  %v505 = vpack.c.bf16 %v459, %v457
  %v506 = vpack.c.bf16 %v460, %v458
  %v507 = vpack.c.bf16 %v463, %v461
  %v508 = vpack.c.bf16 %v464, %v462
  %v509 = vpack.c.bf16 %v467, %v465
  %v510 = vpack.c.bf16 %v468, %v466
  %v511 = vpack.c.bf16 %v471, %v469
  %v512 = vpack.c.bf16 %v472, %v470
  %v513 = vpack.c.bf16 %v475, %v473
  %v514 = vpack.c.bf16 %v476, %v474
  %v515 = vpack.c.bf16 %v479, %v477
  %v516 = vpack.c.bf16 %v480, %v478
  %v517 = vpack.c.bf16 %v483, %v481
  %v518 = vpack.c.bf16 %v484, %v482
  %v519 = vpack.c.bf16 %v487, %v485
  %v520 = vpack.c.bf16 %v488, %v486
  %v521 = vld [vmem:[%s3] sm:$0xff]
  %v522 = vld [vmem:[%s3 + $0x8] sm:$0xff]
  %v523 = vld [vmem:[%s3 + $0x10] sm:$0xff]
  %v524 = vld [vmem:[%s3 + $0x18] sm:$0xff]
  %v525 = vld [vmem:[%s3 + $0x20] sm:$0xff]
  %v526 = vld [vmem:[%s3 + $0x28] sm:$0xff]
  %v527 = vld [vmem:[%s3 + $0x30] sm:$0xff]
  %v528 = vld [vmem:[%s3 + $0x38] sm:$0xff]
  %v529 = vld [vmem:[%s3 + $0x40] sm:$0xff]
  %v530 = vld [vmem:[%s3 + $0x48] sm:$0xff]
  %v531 = vld [vmem:[%s3 + $0x50] sm:$0xff]
  %v532 = vld [vmem:[%s3 + $0x58] sm:$0xff]
  %v533 = vld [vmem:[%s3 + $0x60] sm:$0xff]
  %v534 = vld [vmem:[%s3 + $0x68] sm:$0xff]
  %v535 = vld [vmem:[%s3 + $0x70] sm:$0xff]
  %v536 = vld [vmem:[%s3 + $0x78] sm:$0xff]
  %v537 = vld [vmem:[%s3 + $0x80] sm:$0xff]
  %v538 = vld [vmem:[%s3 + $0x88] sm:$0xff]
  %v539 = vld [vmem:[%s3 + $0x90] sm:$0xff]
  %v540 = vld [vmem:[%s3 + $0x98] sm:$0xff]
  %v541 = vld [vmem:[%s3 + $0xa0] sm:$0xff]
  %v542 = vld [vmem:[%s3 + $0xa8] sm:$0xff]
  %v543 = vld [vmem:[%s3 + $0xb0] sm:$0xff]
  %v544 = vld [vmem:[%s3 + $0xb8] sm:$0xff]
  %v545 = vld [vmem:[%s3 + $0xc0] sm:$0xff]
  %v546 = vld [vmem:[%s3 + $0xc8] sm:$0xff]
  %v547 = vld [vmem:[%s3 + $0xd0] sm:$0xff]
  %v548 = vld [vmem:[%s3 + $0xd8] sm:$0xff]
  %v549 = vld [vmem:[%s3 + $0xe0] sm:$0xff]
  %v550 = vld [vmem:[%s3 + $0xe8] sm:$0xff]
  %v551 = vld [vmem:[%s3 + $0xf0] sm:$0xff]
  %v552 = vld [vmem:[%s3 + $0xf8] sm:$0xff]
  %v553 = vld [vmem:[%s4] sm:$0x3]
  %v555 = vlaneseq
  %v556 = vshrl.u32 %v555, 7
  %v557 = vsub.s32 0, %v556
  %v558 = vrot.slane %v553, %v557
  %v559 = vlaneseq
  %v560 = vshrl.u32 %v559, 7
  %v561 = vsub.s32 1, %v560
  %v562 = vrot.slane %v553, %v561
  %v597 = vunpack.c.l.b16 %v521
  %v598 = vunpack.c.h.b16 %v521
  %v599 = vunpack.c.l.b16 %v522
  %v600 = vunpack.c.h.b16 %v522
  %v601 = vunpack.c.l.b16 %v523
  %v602 = vunpack.c.h.b16 %v523
  %v603 = vunpack.c.l.b16 %v524
  %v604 = vunpack.c.h.b16 %v524
  %v605 = vunpack.c.l.b16 %v525
  %v606 = vunpack.c.h.b16 %v525
  %v607 = vunpack.c.l.b16 %v526
  %v608 = vunpack.c.h.b16 %v526
  %v609 = vunpack.c.l.b16 %v527
  %v610 = vunpack.c.h.b16 %v527
  %v611 = vunpack.c.l.b16 %v528
  %v612 = vunpack.c.h.b16 %v528
  %v613 = vunpack.c.l.b16 %v529
  %v614 = vunpack.c.h.b16 %v529
  %v615 = vunpack.c.l.b16 %v530
  %v616 = vunpack.c.h.b16 %v530
  %v617 = vunpack.c.l.b16 %v531
  %v618 = vunpack.c.h.b16 %v531
  %v619 = vunpack.c.l.b16 %v532
  %v620 = vunpack.c.h.b16 %v532
  %v621 = vunpack.c.l.b16 %v533
  %v622 = vunpack.c.h.b16 %v533
  %v623 = vunpack.c.l.b16 %v534
  %v624 = vunpack.c.h.b16 %v534
  %v625 = vunpack.c.l.b16 %v535
  %v626 = vunpack.c.h.b16 %v535
  %v627 = vunpack.c.l.b16 %v536
  %v628 = vunpack.c.h.b16 %v536
  %v629 = vunpack.c.l.b16 %v537
  %v630 = vunpack.c.h.b16 %v537
  %v631 = vunpack.c.l.b16 %v538
  %v632 = vunpack.c.h.b16 %v538
  %v633 = vunpack.c.l.b16 %v539
  %v634 = vunpack.c.h.b16 %v539
  %v635 = vunpack.c.l.b16 %v540
  %v636 = vunpack.c.h.b16 %v540
  %v637 = vunpack.c.l.b16 %v541
  %v638 = vunpack.c.h.b16 %v541
  %v639 = vunpack.c.l.b16 %v542
  %v640 = vunpack.c.h.b16 %v542
  %v641 = vunpack.c.l.b16 %v543
  %v642 = vunpack.c.h.b16 %v543
  %v643 = vunpack.c.l.b16 %v544
  %v644 = vunpack.c.h.b16 %v544
  %v645 = vunpack.c.l.b16 %v545
  %v646 = vunpack.c.h.b16 %v545
  %v647 = vunpack.c.l.b16 %v546
  %v648 = vunpack.c.h.b16 %v546
  %v649 = vunpack.c.l.b16 %v547
  %v650 = vunpack.c.h.b16 %v547
  %v651 = vunpack.c.l.b16 %v548
  %v652 = vunpack.c.h.b16 %v548
  %v653 = vunpack.c.l.b16 %v549
  %v654 = vunpack.c.h.b16 %v549
  %v655 = vunpack.c.l.b16 %v550
  %v656 = vunpack.c.h.b16 %v550
  %v657 = vunpack.c.l.b16 %v551
  %v658 = vunpack.c.h.b16 %v551
  %v659 = vunpack.c.l.b16 %v552
  %v660 = vunpack.c.h.b16 %v552
  %v661 = vpack.c.b16 %v599, %v597
  %v662 = vpack.c.b16 %v600, %v598
  %v663 = vpack.c.b16 %v603, %v601
  %v664 = vpack.c.b16 %v604, %v602
  %v665 = vpack.c.b16 %v607, %v605
  %v666 = vpack.c.b16 %v608, %v606
  %v667 = vpack.c.b16 %v611, %v609
  %v668 = vpack.c.b16 %v612, %v610
  %v669 = vpack.c.b16 %v615, %v613
  %v670 = vpack.c.b16 %v616, %v614
  %v671 = vpack.c.b16 %v619, %v617
  %v672 = vpack.c.b16 %v620, %v618
  %v673 = vpack.c.b16 %v623, %v621
  %v674 = vpack.c.b16 %v624, %v622
  %v675 = vpack.c.b16 %v627, %v625
  %v676 = vpack.c.b16 %v628, %v626
  %v677 = vpack.c.b16 %v631, %v629
  %v678 = vpack.c.b16 %v632, %v630
  %v679 = vpack.c.b16 %v635, %v633
  %v680 = vpack.c.b16 %v636, %v634
  %v681 = vpack.c.b16 %v639, %v637
  %v682 = vpack.c.b16 %v640, %v638
  %v683 = vpack.c.b16 %v643, %v641
  %v684 = vpack.c.b16 %v644, %v642
  %v685 = vpack.c.b16 %v647, %v645
  %v686 = vpack.c.b16 %v648, %v646
  %v687 = vpack.c.b16 %v651, %v649
  %v688 = vpack.c.b16 %v652, %v650
  %v689 = vpack.c.b16 %v655, %v653
  %v690 = vpack.c.b16 %v656, %v654
  %v691 = vpack.c.b16 %v659, %v657
  %v692 = vpack.c.b16 %v660, %v658
  %725 = vmatprep.subr.bf16.mxu0 %v662
  %726 = vmatpush1.bf16.msra.mxu0 %v661
  %727 = vmatprep.subr.bf16.mxu0 %v664
  %728 = vmatpush1.bf16.msra.mxu0 %v663
  %729 = vmatprep.subr.bf16.mxu0 %v666
  %730 = vmatpush1.bf16.msra.mxu0 %v665
  %731 = vmatprep.subr.bf16.mxu0 %v668
  %732 = vmatpush1.bf16.msra.mxu0 %v667
  %733 = vmatprep.subr.bf16.mxu0 %v670
  %734 = vmatpush1.bf16.msra.mxu0 %v669
  %735 = vmatprep.subr.bf16.mxu0 %v672
  %736 = vmatpush1.bf16.msra.mxu0 %v671
  %737 = vmatprep.subr.bf16.mxu0 %v674
  %738 = vmatpush1.bf16.msra.mxu0 %v673
  %739 = vmatprep.subr.bf16.mxu0 %v676
  %740 = vmatpush1.bf16.msra.mxu0 %v675
  %741 = vmatprep.subr.bf16.mxu0 %v678
  %742 = vmatpush1.bf16.msra.mxu0 %v677
  %743 = vmatprep.subr.bf16.mxu0 %v680
  %744 = vmatpush1.bf16.msra.mxu0 %v679
  %745 = vmatprep.subr.bf16.mxu0 %v682
  %746 = vmatpush1.bf16.msra.mxu0 %v681
  %747 = vmatprep.subr.bf16.mxu0 %v684
  %748 = vmatpush1.bf16.msra.mxu0 %v683
  %749 = vmatprep.subr.bf16.mxu0 %v686
  %750 = vmatpush1.bf16.msra.mxu0 %v685
  %751 = vmatprep.subr.bf16.mxu0 %v688
  %752 = vmatpush1.bf16.msra.mxu0 %v687
  %753 = vmatprep.subr.bf16.mxu0 %v690
  %754 = vmatpush1.bf16.msra.mxu0 %v689
  %755 = vmatprep.subr.bf16.mxu0 %v692
  %756 = vmatpush1.bf16.msra.mxu0 %v691
  %757 = vmatprep.mubr.bf16.mxu0 %v490
  %758 = vmatmul.mubr.bf16.gmra.mrb[0].mxu0 %v489
  %v759 = vpop.f32.mrb[0].mxu0
  %v760 = vadd.f32 %v558, %v759
  %v761 = vpop.f32.mrb[0].mxu0
  %v762 = vadd.f32 %v562, %v761
  %v763 = vpop.f32.mrb[0].mxu0
  %v764 = vadd.f32 %v558, %v763
  %v765 = vpop.f32.mrb[0].mxu0
  %v766 = vadd.f32 %v562, %v765
  %767 = vmatprep.mubr.bf16.mxu0 %v492
  %768 = vmatmul.mubr.bf16.gmra.mrb[0].mxu0 %v491
  %v769 = vpop.f32.mrb[0].mxu0
  %v770 = vadd.f32 %v558, %v769
  %v771 = vpop.f32.mrb[0].mxu0
  %v772 = vadd.f32 %v562, %v771
  %v773 = vpop.f32.mrb[0].mxu0
  %v774 = vadd.f32 %v558, %v773
  %v775 = vpop.f32.mrb[0].mxu0
  %v776 = vadd.f32 %v562, %v775
  %777 = vmatprep.mubr.bf16.mxu0 %v494
  %778 = vmatmul.mubr.bf16.gmra.mrb[0].mxu0 %v493
  %v779 = vpop.f32.mrb[0].mxu0
  %v780 = vadd.f32 %v558, %v779
  %v781 = vpop.f32.mrb[0].mxu0
  %v782 = vadd.f32 %v562, %v781
  %v783 = vpop.f32.mrb[0].mxu0
  %v784 = vadd.f32 %v558, %v783
  %v785 = vpop.f32.mrb[0].mxu0
  %v786 = vadd.f32 %v562, %v785
  %787 = vmatprep.mubr.bf16.mxu0 %v496
  %788 = vmatmul.mubr.bf16.gmra.mrb[0].mxu0 %v495
  %v789 = vpop.f32.mrb[0].mxu0
  %v790 = vadd.f32 %v558, %v789
  %v791 = vpop.f32.mrb[0].mxu0
  %v792 = vadd.f32 %v562, %v791
  %v793 = vpop.f32.mrb[0].mxu0
  %v794 = vadd.f32 %v558, %v793
  %v795 = vpop.f32.mrb[0].mxu0
  %v796 = vadd.f32 %v562, %v795
  %797 = vmatprep.mubr.bf16.mxu0 %v498
  %798 = vmatmul.mubr.bf16.gmra.mrb[0].mxu0 %v497
  %v799 = vpop.f32.mrb[0].mxu0
  %v800 = vadd.f32 %v558, %v799
  %v801 = vpop.f32.mrb[0].mxu0
  %v802 = vadd.f32 %v562, %v801
  %v803 = vpop.f32.mrb[0].mxu0
  %v804 = vadd.f32 %v558, %v803
  %v805 = vpop.f32.mrb[0].mxu0
  %v806 = vadd.f32 %v562, %v805
  %807 = vmatprep.mubr.bf16.mxu0 %v500
  %808 = vmatmul.mubr.bf16.gmra.mrb[0].mxu0 %v499
  %v809 = vpop.f32.mrb[0].mxu0
  %v810 = vadd.f32 %v558, %v809
  %v811 = vpop.f32.mrb[0].mxu0
  %v812 = vadd.f32 %v562, %v811
  %v813 = vpop.f32.mrb[0].mxu0
  %v814 = vadd.f32 %v558, %v813
  %v815 = vpop.f32.mrb[0].mxu0
  %v816 = vadd.f32 %v562, %v815
  %817 = vmatprep.mubr.bf16.mxu0 %v502
  %818 = vmatmul.mubr.bf16.gmra.mrb[0].mxu0 %v501
  %v819 = vpop.f32.mrb[0].mxu0
  %v820 = vadd.f32 %v558, %v819
  %v821 = vpop.f32.mrb[0].mxu0
  %v822 = vadd.f32 %v562, %v821
  %v823 = vpop.f32.mrb[0].mxu0
  %v824 = vadd.f32 %v558, %v823
  %v825 = vpop.f32.mrb[0].mxu0
  %v826 = vadd.f32 %v562, %v825
  %827 = vmatprep.mubr.bf16.mxu0 %v504
  %828 = vmatmul.mubr.bf16.gmra.mrb[0].mxu0 %v503
  %v829 = vpop.f32.mrb[0].mxu0
  %v830 = vadd.f32 %v558, %v829
  %v831 = vpop.f32.mrb[0].mxu0
  %v832 = vadd.f32 %v562, %v831
  %v833 = vpop.f32.mrb[0].mxu0
  %v834 = vadd.f32 %v558, %v833
  %v835 = vpop.f32.mrb[0].mxu0
  %v836 = vadd.f32 %v562, %v835
  %837 = vmatprep.mubr.bf16.mxu0 %v506
  %838 = vmatmul.mubr.bf16.gmra.mrb[0].mxu0 %v505
  %v839 = vpop.f32.mrb[0].mxu0
  %v840 = vadd.f32 %v558, %v839
  %v841 = vpop.f32.mrb[0].mxu0
  %v842 = vadd.f32 %v562, %v841
  %v843 = vpop.f32.mrb[0].mxu0
  %v844 = vadd.f32 %v558, %v843
  %v845 = vpop.f32.mrb[0].mxu0
  %v846 = vadd.f32 %v562, %v845
  %847 = vmatprep.mubr.bf16.mxu0 %v508
  %848 = vmatmul.mubr.bf16.gmra.mrb[0].mxu0 %v507
  %v849 = vpop.f32.mrb[0].mxu0
  %v850 = vadd.f32 %v558, %v849
  %v851 = vpop.f32.mrb[0].mxu0
  %v852 = vadd.f32 %v562, %v851
  %v853 = vpop.f32.mrb[0].mxu0
  %v854 = vadd.f32 %v558, %v853
  %v855 = vpop.f32.mrb[0].mxu0
  %v856 = vadd.f32 %v562, %v855
  %857 = vmatprep.mubr.bf16.mxu0 %v510
  %858 = vmatmul.mubr.bf16.gmra.mrb[0].mxu0 %v509
  %v859 = vpop.f32.mrb[0].mxu0
  %v860 = vadd.f32 %v558, %v859
  %v861 = vpop.f32.mrb[0].mxu0
  %v862 = vadd.f32 %v562, %v861
  %v863 = vpop.f32.mrb[0].mxu0
  %v864 = vadd.f32 %v558, %v863
  %v865 = vpop.f32.mrb[0].mxu0
  %v866 = vadd.f32 %v562, %v865
  %867 = vmatprep.mubr.bf16.mxu0 %v512
  %868 = vmatmul.mubr.bf16.gmra.mrb[0].mxu0 %v511
  %v869 = vpop.f32.mrb[0].mxu0
  %v870 = vadd.f32 %v558, %v869
  %v871 = vpop.f32.mrb[0].mxu0
  %v872 = vadd.f32 %v562, %v871
  %v873 = vpop.f32.mrb[0].mxu0
  %v874 = vadd.f32 %v558, %v873
  %v875 = vpop.f32.mrb[0].mxu0
  %v876 = vadd.f32 %v562, %v875
  %877 = vmatprep.mubr.bf16.mxu0 %v514
  %878 = vmatmul.mubr.bf16.gmra.mrb[0].mxu0 %v513
  %v879 = vpop.f32.mrb[0].mxu0
  %v880 = vadd.f32 %v558, %v879
  %v881 = vpop.f32.mrb[0].mxu0
  %v882 = vadd.f32 %v562, %v881
  %v883 = vpop.f32.mrb[0].mxu0
  %v884 = vadd.f32 %v558, %v883
  %v885 = vpop.f32.mrb[0].mxu0
  %v886 = vadd.f32 %v562, %v885
  %887 = vmatprep.mubr.bf16.mxu0 %v516
  %888 = vmatmul.mubr.bf16.gmra.mrb[0].mxu0 %v515
  %v889 = vpop.f32.mrb[0].mxu0
  %v890 = vadd.f32 %v558, %v889
  %v891 = vpop.f32.mrb[0].mxu0
  %v892 = vadd.f32 %v562, %v891
  %v893 = vpop.f32.mrb[0].mxu0
  %v894 = vadd.f32 %v558, %v893
  %v895 = vpop.f32.mrb[0].mxu0
  %v896 = vadd.f32 %v562, %v895
  %897 = vmatprep.mubr.bf16.mxu0 %v518
  %898 = vmatmul.mubr.bf16.gmra.mrb[0].mxu0 %v517
  %v899 = vpop.f32.mrb[0].mxu0
  %v900 = vadd.f32 %v558, %v899
  %v901 = vpop.f32.mrb[0].mxu0
  %v902 = vadd.f32 %v562, %v901
  %v903 = vpop.f32.mrb[0].mxu0
  %v904 = vadd.f32 %v558, %v903
  %v905 = vpop.f32.mrb[0].mxu0
  %v906 = vadd.f32 %v562, %v905
  %907 = vmatprep.mubr.bf16.mxu0 %v520
  %908 = vmatmul.mubr.bf16.gmra.mrb[0].mxu0 %v519
  %v909 = vpop.f32.mrb[0].mxu0
  %v910 = vadd.f32 %v558, %v909
  %v911 = vpop.f32.mrb[0].mxu0
  %v912 = vadd.f32 %v562, %v911
  %v913 = vpop.f32.mrb[0].mxu0
  %v914 = vadd.f32 %v558, %v913
  %v915 = vpop.f32.mrb[0].mxu0
  %v916 = vadd.f32 %v562, %v915
  %917 = vdwg.mxu0
  %v918 = vmax.f32 %v760, 0.0
  %v919 = vmax.f32 %v762, 0.0
  %v920 = vmax.f32 %v764, 0.0
  %v921 = vmax.f32 %v766, 0.0
  %v922 = vmax.f32 %v770, 0.0
  %v923 = vmax.f32 %v772, 0.0
  %v924 = vmax.f32 %v774, 0.0
  %v925 = vmax.f32 %v776, 0.0
  %v926 = vmax.f32 %v780, 0.0
  %v927 = vmax.f32 %v782, 0.0
  %v928 = vmax.f32 %v784, 0.0
  %v929 = vmax.f32 %v786, 0.0
  %v930 = vmax.f32 %v790, 0.0
  %v931 = vmax.f32 %v792, 0.0
  %v932 = vmax.f32 %v794, 0.0
  %v933 = vmax.f32 %v796, 0.0
  %v934 = vmax.f32 %v800, 0.0
  %v935 = vmax.f32 %v802, 0.0
  %v936 = vmax.f32 %v804, 0.0
  %v937 = vmax.f32 %v806, 0.0
  %v938 = vmax.f32 %v810, 0.0
  %v939 = vmax.f32 %v812, 0.0
  %v940 = vmax.f32 %v814, 0.0
  %v941 = vmax.f32 %v816, 0.0
  %v942 = vmax.f32 %v820, 0.0
  %v943 = vmax.f32 %v822, 0.0
  %v944 = vmax.f32 %v824, 0.0
  %v945 = vmax.f32 %v826, 0.0
  %v946 = vmax.f32 %v830, 0.0
  %v947 = vmax.f32 %v832, 0.0
  %v948 = vmax.f32 %v834, 0.0
  %v949 = vmax.f32 %v836, 0.0
  %v950 = vmax.f32 %v840, 0.0
  %v951 = vmax.f32 %v842, 0.0
  %v952 = vmax.f32 %v844, 0.0
  %v953 = vmax.f32 %v846, 0.0
  %v954 = vmax.f32 %v850, 0.0
  %v955 = vmax.f32 %v852, 0.0
  %v956 = vmax.f32 %v854, 0.0
  %v957 = vmax.f32 %v856, 0.0
  %v958 = vmax.f32 %v860, 0.0
  %v959 = vmax.f32 %v862, 0.0
  %v960 = vmax.f32 %v864, 0.0
  %v961 = vmax.f32 %v866, 0.0
  %v962 = vmax.f32 %v870, 0.0
  %v963 = vmax.f32 %v872, 0.0
  %v964 = vmax.f32 %v874, 0.0
  %v965 = vmax.f32 %v876, 0.0
  %v966 = vmax.f32 %v880, 0.0
  %v967 = vmax.f32 %v882, 0.0
  %v968 = vmax.f32 %v884, 0.0
  %v969 = vmax.f32 %v886, 0.0
  %v970 = vmax.f32 %v890, 0.0
  %v971 = vmax.f32 %v892, 0.0
  %v972 = vmax.f32 %v894, 0.0
  %v973 = vmax.f32 %v896, 0.0
  %v974 = vmax.f32 %v900, 0.0
  %v975 = vmax.f32 %v902, 0.0
  %v976 = vmax.f32 %v904, 0.0
  %v977 = vmax.f32 %v906, 0.0
  %v978 = vmax.f32 %v910, 0.0
  %v979 = vmax.f32 %v912, 0.0
  %v980 = vmax.f32 %v914, 0.0
  %v981 = vmax.f32 %v916, 0.0
  %v982 = vpack.c.bf16 %v920, %v918
  %v983 = vpack.c.bf16 %v921, %v919
  %v984 = vpack.c.bf16 %v924, %v922
  %v985 = vpack.c.bf16 %v925, %v923
  %v986 = vpack.c.bf16 %v928, %v926
  %v987 = vpack.c.bf16 %v929, %v927
  %v988 = vpack.c.bf16 %v932, %v930
  %v989 = vpack.c.bf16 %v933, %v931
  %v990 = vpack.c.bf16 %v936, %v934
  %v991 = vpack.c.bf16 %v937, %v935
  %v992 = vpack.c.bf16 %v940, %v938
  %v993 = vpack.c.bf16 %v941, %v939
  %v994 = vpack.c.bf16 %v944, %v942
  %v995 = vpack.c.bf16 %v945, %v943
  %v996 = vpack.c.bf16 %v948, %v946
  %v997 = vpack.c.bf16 %v949, %v947
  %v998 = vpack.c.bf16 %v952, %v950
  %v999 = vpack.c.bf16 %v953, %v951
  %v1000 = vpack.c.bf16 %v956, %v954
  %v1001 = vpack.c.bf16 %v957, %v955
  %v1002 = vpack.c.bf16 %v960, %v958
  %v1003 = vpack.c.bf16 %v961, %v959
  %v1004 = vpack.c.bf16 %v964, %v962
  %v1005 = vpack.c.bf16 %v965, %v963
  %v1006 = vpack.c.bf16 %v968, %v966
  %v1007 = vpack.c.bf16 %v969, %v967
  %v1008 = vpack.c.bf16 %v972, %v970
  %v1009 = vpack.c.bf16 %v973, %v971
  %v1010 = vpack.c.bf16 %v976, %v974
  %v1011 = vpack.c.bf16 %v977, %v975
  %v1012 = vpack.c.bf16 %v980, %v978
  %v1013 = vpack.c.bf16 %v981, %v979
  %v1014 = vld [vmem:[%s5] sm:$0xf]
  %v1015 = vld [vmem:[%s5 + $0x4] sm:$0xf]
  %v1016 = vld [vmem:[%s5 + $0x8] sm:$0xf]
  %v1017 = vld [vmem:[%s5 + $0xc] sm:$0xf]
  %v1018 = vld [vmem:[%s5 + $0x10] sm:$0xf]
  %v1019 = vld [vmem:[%s5 + $0x14] sm:$0xf]
  %v1020 = vld [vmem:[%s5 + $0x18] sm:$0xf]
  %v1021 = vld [vmem:[%s5 + $0x1c] sm:$0xf]
  %v1022 = vld [vmem:[%s5 + $0x20] sm:$0xf]
  %v1023 = vld [vmem:[%s5 + $0x24] sm:$0xf]
  %v1024 = vld [vmem:[%s5 + $0x28] sm:$0xf]
  %v1025 = vld [vmem:[%s5 + $0x2c] sm:$0xf]
  %v1026 = vld [vmem:[%s5 + $0x30] sm:$0xf]
  %v1027 = vld [vmem:[%s5 + $0x34] sm:$0xf]
  %v1028 = vld [vmem:[%s5 + $0x38] sm:$0xf]
  %v1029 = vld [vmem:[%s5 + $0x3c] sm:$0xf]
  %v1030 = vld [vmem:[%s5 + $0x40] sm:$0xf]
  %v1031 = vld [vmem:[%s5 + $0x44] sm:$0xf]
  %v1032 = vld [vmem:[%s5 + $0x48] sm:$0xf]
  %v1033 = vld [vmem:[%s5 + $0x4c] sm:$0xf]
  %v1034 = vld [vmem:[%s5 + $0x50] sm:$0xf]
  %v1035 = vld [vmem:[%s5 + $0x54] sm:$0xf]
  %v1036 = vld [vmem:[%s5 + $0x58] sm:$0xf]
  %v1037 = vld [vmem:[%s5 + $0x5c] sm:$0xf]
  %v1038 = vld [vmem:[%s5 + $0x60] sm:$0xf]
  %v1039 = vld [vmem:[%s5 + $0x64] sm:$0xf]
  %v1040 = vld [vmem:[%s5 + $0x68] sm:$0xf]
  %v1041 = vld [vmem:[%s5 + $0x6c] sm:$0xf]
  %v1042 = vld [vmem:[%s5 + $0x70] sm:$0xf]
  %v1043 = vld [vmem:[%s5 + $0x74] sm:$0xf]
  %v1044 = vld [vmem:[%s5 + $0x78] sm:$0xf]
  %v1045 = vld [vmem:[%s5 + $0x7c] sm:$0xf]
  %v1046 = vld [vmem:[%s6] sm:$0x1]
  %v1048 = vlaneseq
  %v1049 = vshrl.u32 %v1048, 7
  %v1050 = vsub.s32 0, %v1049
  %v1051 = vrot.slane %v1046, %v1050
  %v1085 = vunpack.c.l.b16 %v1014
  %v1086 = vunpack.c.l.b16 %v1015
  %v1087 = vunpack.c.l.b16 %v1016
  %v1088 = vunpack.c.l.b16 %v1017
  %v1089 = vunpack.c.l.b16 %v1018
  %v1090 = vunpack.c.l.b16 %v1019
  %v1091 = vunpack.c.l.b16 %v1020
  %v1092 = vunpack.c.l.b16 %v1021
  %v1093 = vunpack.c.l.b16 %v1022
  %v1094 = vunpack.c.l.b16 %v1023
  %v1095 = vunpack.c.l.b16 %v1024
  %v1096 = vunpack.c.l.b16 %v1025
  %v1097 = vunpack.c.l.b16 %v1026
  %v1098 = vunpack.c.l.b16 %v1027
  %v1099 = vunpack.c.l.b16 %v1028
  %v1100 = vunpack.c.l.b16 %v1029
  %v1101 = vunpack.c.l.b16 %v1030
  %v1102 = vunpack.c.l.b16 %v1031
  %v1103 = vunpack.c.l.b16 %v1032
  %v1104 = vunpack.c.l.b16 %v1033
  %v1105 = vunpack.c.l.b16 %v1034
  %v1106 = vunpack.c.l.b16 %v1035
  %v1107 = vunpack.c.l.b16 %v1036
  %v1108 = vunpack.c.l.b16 %v1037
  %v1109 = vunpack.c.l.b16 %v1038
  %v1110 = vunpack.c.l.b16 %v1039
  %v1111 = vunpack.c.l.b16 %v1040
  %v1112 = vunpack.c.l.b16 %v1041
  %v1113 = vunpack.c.l.b16 %v1042
  %v1114 = vunpack.c.l.b16 %v1043
  %v1115 = vunpack.c.l.b16 %v1044
  %v1116 = vunpack.c.l.b16 %v1045
  %v1117 = vpack.c.b16 %v1086, %v1085
  %v1118 = vpack.c.b16 %v1088, %v1087
  %v1119 = vpack.c.b16 %v1090, %v1089
  %v1120 = vpack.c.b16 %v1092, %v1091
  %v1121 = vpack.c.b16 %v1094, %v1093
  %v1122 = vpack.c.b16 %v1096, %v1095
  %v1123 = vpack.c.b16 %v1098, %v1097
  %v1124 = vpack.c.b16 %v1100, %v1099
  %v1125 = vpack.c.b16 %v1102, %v1101
  %v1126 = vpack.c.b16 %v1104, %v1103
  %v1127 = vpack.c.b16 %v1106, %v1105
  %v1128 = vpack.c.b16 %v1108, %v1107
  %v1129 = vpack.c.b16 %v1110, %v1109
  %v1130 = vpack.c.b16 %v1112, %v1111
  %v1131 = vpack.c.b16 %v1114, %v1113
  %v1132 = vpack.c.b16 %v1116, %v1115
  %1149 = vmatprep.subr.bf16.mxu0 0
  %1150 = vmatpush1.bf16.msra.mxu0 %v1117
  %1151 = vmatprep.subr.bf16.mxu0 0
  %1152 = vmatpush1.bf16.msra.mxu0 %v1118
  %1153 = vmatprep.subr.bf16.mxu0 0
  %1154 = vmatpush1.bf16.msra.mxu0 %v1119
  %1155 = vmatprep.subr.bf16.mxu0 0
  %1156 = vmatpush1.bf16.msra.mxu0 %v1120
  %1157 = vmatprep.subr.bf16.mxu0 0
  %1158 = vmatpush1.bf16.msra.mxu0 %v1121
  %1159 = vmatprep.subr.bf16.mxu0 0
  %1160 = vmatpush1.bf16.msra.mxu0 %v1122
  %1161 = vmatprep.subr.bf16.mxu0 0
  %1162 = vmatpush1.bf16.msra.mxu0 %v1123
  %1163 = vmatprep.subr.bf16.mxu0 0
  %1164 = vmatpush1.bf16.msra.mxu0 %v1124
  %1165 = vmatprep.subr.bf16.mxu0 0
  %1166 = vmatpush1.bf16.msra.mxu0 %v1125
  %1167 = vmatprep.subr.bf16.mxu0 0
  %1168 = vmatpush1.bf16.msra.mxu0 %v1126
  %1169 = vmatprep.subr.bf16.mxu0 0
  %1170 = vmatpush1.bf16.msra.mxu0 %v1127
  %1171 = vmatprep.subr.bf16.mxu0 0
  %1172 = vmatpush1.bf16.msra.mxu0 %v1128
  %1173 = vmatprep.subr.bf16.mxu0 0
  %1174 = vmatpush1.bf16.msra.mxu0 %v1129
  %1175 = vmatprep.subr.bf16.mxu0 0
  %1176 = vmatpush1.bf16.msra.mxu0 %v1130
  %1177 = vmatprep.subr.bf16.mxu0 0
  %1178 = vmatpush1.bf16.msra.mxu0 %v1131
  %1179 = vmatprep.subr.bf16.mxu0 0
  %1180 = vmatpush1.bf16.msra.mxu0 %v1132
  %1181 = vmatprep.mubr.bf16.mxu0 %v983
  %1182 = vmatmul.mubr.bf16.gmra.mrb[0].mxu0 %v982
  %v1183 = vpop.f32.mrb[0].mxu0
  %v1184 = vadd.f32 %v1051, %v1183
  %v1185 = vpop.f32.mrb[0].mxu0
  %v1186 = vpop.f32.mrb[0].mxu0
  %v1187 = vadd.f32 %v1051, %v1186
  %v1188 = vpop.f32.mrb[0].mxu0
  %1189 = vmatprep.mubr.bf16.mxu0 %v985
  %1190 = vmatmul.mubr.bf16.gmra.mrb[0].mxu0 %v984
  %v1191 = vpop.f32.mrb[0].mxu0
  %v1192 = vadd.f32 %v1051, %v1191
  %v1193 = vpop.f32.mrb[0].mxu0
  %v1194 = vpop.f32.mrb[0].mxu0
  %v1195 = vadd.f32 %v1051, %v1194
  %v1196 = vpop.f32.mrb[0].mxu0
  %1197 = vmatprep.mubr.bf16.mxu0 %v987
  %1198 = vmatmul.mubr.bf16.gmra.mrb[0].mxu0 %v986
  %v1199 = vpop.f32.mrb[0].mxu0
  %v1200 = vadd.f32 %v1051, %v1199
  %v1201 = vpop.f32.mrb[0].mxu0
  %v1202 = vpop.f32.mrb[0].mxu0
  %v1203 = vadd.f32 %v1051, %v1202
  %v1204 = vpop.f32.mrb[0].mxu0
  %1205 = vmatprep.mubr.bf16.mxu0 %v989
  %1206 = vmatmul.mubr.bf16.gmra.mrb[0].mxu0 %v988
  %v1207 = vpop.f32.mrb[0].mxu0
  %v1208 = vadd.f32 %v1051, %v1207
  %v1209 = vpop.f32.mrb[0].mxu0
  %v1210 = vpop.f32.mrb[0].mxu0
  %v1211 = vadd.f32 %v1051, %v1210
  %v1212 = vpop.f32.mrb[0].mxu0
  %1213 = vmatprep.mubr.bf16.mxu0 %v991
  %1214 = vmatmul.mubr.bf16.gmra.mrb[0].mxu0 %v990
  %v1215 = vpop.f32.mrb[0].mxu0
  %v1216 = vadd.f32 %v1051, %v1215
  %v1217 = vpop.f32.mrb[0].mxu0
  %v1218 = vpop.f32.mrb[0].mxu0
  %v1219 = vadd.f32 %v1051, %v1218
  %v1220 = vpop.f32.mrb[0].mxu0
  %1221 = vmatprep.mubr.bf16.mxu0 %v993
  %1222 = vmatmul.mubr.bf16.gmra.mrb[0].mxu0 %v992
  %v1223 = vpop.f32.mrb[0].mxu0
  %v1224 = vadd.f32 %v1051, %v1223
  %v1225 = vpop.f32.mrb[0].mxu0
  %v1226 = vpop.f32.mrb[0].mxu0
  %v1227 = vadd.f32 %v1051, %v1226
  %v1228 = vpop.f32.mrb[0].mxu0
  %1229 = vmatprep.mubr.bf16.mxu0 %v995
  %1230 = vmatmul.mubr.bf16.gmra.mrb[0].mxu0 %v994
  %v1231 = vpop.f32.mrb[0].mxu0
  %v1232 = vadd.f32 %v1051, %v1231
  %v1233 = vpop.f32.mrb[0].mxu0
  %v1234 = vpop.f32.mrb[0].mxu0
  %v1235 = vadd.f32 %v1051, %v1234
  %v1236 = vpop.f32.mrb[0].mxu0
  %1237 = vmatprep.mubr.bf16.mxu0 %v997
  %1238 = vmatmul.mubr.bf16.gmra.mrb[0].mxu0 %v996
  %v1239 = vpop.f32.mrb[0].mxu0
  %v1240 = vadd.f32 %v1051, %v1239
  %v1241 = vpop.f32.mrb[0].mxu0
  %v1242 = vpop.f32.mrb[0].mxu0
  %v1243 = vadd.f32 %v1051, %v1242
  %v1244 = vpop.f32.mrb[0].mxu0
  %1245 = vmatprep.mubr.bf16.mxu0 %v999
  %1246 = vmatmul.mubr.bf16.gmra.mrb[0].mxu0 %v998
  %v1247 = vpop.f32.mrb[0].mxu0
  %v1248 = vadd.f32 %v1051, %v1247
  %v1249 = vpop.f32.mrb[0].mxu0
  %v1250 = vpop.f32.mrb[0].mxu0
  %v1251 = vadd.f32 %v1051, %v1250
  %v1252 = vpop.f32.mrb[0].mxu0
  %1253 = vmatprep.mubr.bf16.mxu0 %v1001
  %1254 = vmatmul.mubr.bf16.gmra.mrb[0].mxu0 %v1000
  %v1255 = vpop.f32.mrb[0].mxu0
  %v1256 = vadd.f32 %v1051, %v1255
  %v1257 = vpop.f32.mrb[0].mxu0
  %v1258 = vpop.f32.mrb[0].mxu0
  %v1259 = vadd.f32 %v1051, %v1258
  %v1260 = vpop.f32.mrb[0].mxu0
  %1261 = vmatprep.mubr.bf16.mxu0 %v1003
  %1262 = vmatmul.mubr.bf16.gmra.mrb[0].mxu0 %v1002
  %v1263 = vpop.f32.mrb[0].mxu0
  %v1264 = vadd.f32 %v1051, %v1263
  %v1265 = vpop.f32.mrb[0].mxu0
  %v1266 = vpop.f32.mrb[0].mxu0
  %v1267 = vadd.f32 %v1051, %v1266
  %v1268 = vpop.f32.mrb[0].mxu0
  %1269 = vmatprep.mubr.bf16.mxu0 %v1005
  %1270 = vmatmul.mubr.bf16.gmra.mrb[0].mxu0 %v1004
  %v1271 = vpop.f32.mrb[0].mxu0
  %v1272 = vadd.f32 %v1051, %v1271
  %v1273 = vpop.f32.mrb[0].mxu0
  %v1274 = vpop.f32.mrb[0].mxu0
  %v1275 = vadd.f32 %v1051, %v1274
  %v1276 = vpop.f32.mrb[0].mxu0
  %1277 = vmatprep.mubr.bf16.mxu0 %v1007
  %1278 = vmatmul.mubr.bf16.gmra.mrb[0].mxu0 %v1006
  %v1279 = vpop.f32.mrb[0].mxu0
  %v1280 = vadd.f32 %v1051, %v1279
  %v1281 = vpop.f32.mrb[0].mxu0
  %v1282 = vpop.f32.mrb[0].mxu0
  %v1283 = vadd.f32 %v1051, %v1282
  %v1284 = vpop.f32.mrb[0].mxu0
  %1285 = vmatprep.mubr.bf16.mxu0 %v1009
  %1286 = vmatmul.mubr.bf16.gmra.mrb[0].mxu0 %v1008
  %v1287 = vpop.f32.mrb[0].mxu0
  %v1288 = vadd.f32 %v1051, %v1287
  %v1289 = vpop.f32.mrb[0].mxu0
  %v1290 = vpop.f32.mrb[0].mxu0
  %v1291 = vadd.f32 %v1051, %v1290
  %v1292 = vpop.f32.mrb[0].mxu0
  %1293 = vmatprep.mubr.bf16.mxu0 %v1011
  %1294 = vmatmul.mubr.bf16.gmra.mrb[0].mxu0 %v1010
  %v1295 = vpop.f32.mrb[0].mxu0
  %v1296 = vadd.f32 %v1051, %v1295
  %v1297 = vpop.f32.mrb[0].mxu0
  %v1298 = vpop.f32.mrb[0].mxu0
  %v1299 = vadd.f32 %v1051, %v1298
  %v1300 = vpop.f32.mrb[0].mxu0
  %1301 = vmatprep.mubr.bf16.mxu0 %v1013
  %1302 = vmatmul.mubr.bf16.gmra.mrb[0].mxu0 %v1012
  %v1303 = vpop.f32.mrb[0].mxu0
  %v1304 = vadd.f32 %v1051, %v1303
  %v1305 = vpop.f32.mrb[0].mxu0
  %v1306 = vpop.f32.mrb[0].mxu0
  %v1307 = vadd.f32 %v1051, %v1306
  %v1308 = vpop.f32.mrb[0].mxu0
  %1309 = vdwg.mxu0
  %vm1310 = vcmask 64512
  %1311 = vst.msk [vmem:[%s9] sm:$0xff] %vm1310, %v1184
  %1312 = vst.msk [vmem:[%s9 + $0x8] sm:$0xff] %vm1310, %v1187
  %1313 = vst.msk [vmem:[%s9 + $0x10] sm:$0xff] %vm1310, %v1192
  %1314 = vst.msk [vmem:[%s9 + $0x18] sm:$0xff] %vm1310, %v1195
  %1315 = vst.msk [vmem:[%s9 + $0x20] sm:$0xff] %vm1310, %v1200
  %1316 = vst.msk [vmem:[%s9 + $0x28] sm:$0xff] %vm1310, %v1203
  %1317 = vst.msk [vmem:[%s9 + $0x30] sm:$0xff] %vm1310, %v1208
  %1318 = vst.msk [vmem:[%s9 + $0x38] sm:$0xff] %vm1310, %v1211
  %1319 = vst.msk [vmem:[%s9 + $0x40] sm:$0xff] %vm1310, %v1216
  %1320 = vst.msk [vmem:[%s9 + $0x48] sm:$0xff] %vm1310, %v1219
  %1321 = vst.msk [vmem:[%s9 + $0x50] sm:$0xff] %vm1310, %v1224
  %1322 = vst.msk [vmem:[%s9 + $0x58] sm:$0xff] %vm1310, %v1227
  %1323 = vst.msk [vmem:[%s9 + $0x60] sm:$0xff] %vm1310, %v1232
  %1324 = vst.msk [vmem:[%s9 + $0x68] sm:$0xff] %vm1310, %v1235
  %1325 = vst.msk [vmem:[%s9 + $0x70] sm:$0xff] %vm1310, %v1240
  %1326 = vst.msk [vmem:[%s9 + $0x78] sm:$0xff] %vm1310, %v1243
  %1327 = vst.msk [vmem:[%s9 + $0x80] sm:$0xff] %vm1310, %v1248
  %1328 = vst.msk [vmem:[%s9 + $0x88] sm:$0xff] %vm1310, %v1251
  %1329 = vst.msk [vmem:[%s9 + $0x90] sm:$0xff] %vm1310, %v1256
  %1330 = vst.msk [vmem:[%s9 + $0x98] sm:$0xff] %vm1310, %v1259
  %1331 = vst.msk [vmem:[%s9 + $0xa0] sm:$0xff] %vm1310, %v1264
  %1332 = vst.msk [vmem:[%s9 + $0xa8] sm:$0xff] %vm1310, %v1267
  %1333 = vst.msk [vmem:[%s9 + $0xb0] sm:$0xff] %vm1310, %v1272
  %1334 = vst.msk [vmem:[%s9 + $0xb8] sm:$0xff] %vm1310, %v1275
  %1335 = vst.msk [vmem:[%s9 + $0xc0] sm:$0xff] %vm1310, %v1280
  %1336 = vst.msk [vmem:[%s9 + $0xc8] sm:$0xff] %vm1310, %v1283
  %1337 = vst.msk [vmem:[%s9 + $0xd0] sm:$0xff] %vm1310, %v1288
  %1338 = vst.msk [vmem:[%s9 + $0xd8] sm:$0xff] %vm1310, %v1291
  %1339 = vst.msk [vmem:[%s9 + $0xe0] sm:$0xff] %vm1310, %v1296
  %1340 = vst.msk [vmem:[%s9 + $0xe8] sm:$0xff] %vm1310, %v1299
  %1341 = vst.msk [vmem:[%s9 + $0xf0] sm:$0xff] %vm1310, %v1304
  %1342 = vst.msk [vmem:[%s9 + $0xf8] sm:$0xff] %vm1310, %v1307
  %v1343 = vld [vmem:[%s7] sm:$0xf]
  %v1344 = vld [vmem:[%s7 + $0x4] sm:$0xf]
  %v1345 = vld [vmem:[%s7 + $0x8] sm:$0xf]
  %v1346 = vld [vmem:[%s7 + $0xc] sm:$0xf]
  %v1347 = vld [vmem:[%s7 + $0x10] sm:$0xf]
  %v1348 = vld [vmem:[%s7 + $0x14] sm:$0xf]
  %v1349 = vld [vmem:[%s7 + $0x18] sm:$0xf]
  %v1350 = vld [vmem:[%s7 + $0x1c] sm:$0xf]
  %v1351 = vld [vmem:[%s7 + $0x20] sm:$0xf]
  %v1352 = vld [vmem:[%s7 + $0x24] sm:$0xf]
  %v1353 = vld [vmem:[%s7 + $0x28] sm:$0xf]
  %v1354 = vld [vmem:[%s7 + $0x2c] sm:$0xf]
  %v1355 = vld [vmem:[%s7 + $0x30] sm:$0xf]
  %v1356 = vld [vmem:[%s7 + $0x34] sm:$0xf]
  %v1357 = vld [vmem:[%s7 + $0x38] sm:$0xf]
  %v1358 = vld [vmem:[%s7 + $0x3c] sm:$0xf]
  %v1359 = vld [vmem:[%s7 + $0x40] sm:$0xf]
  %v1360 = vld [vmem:[%s7 + $0x44] sm:$0xf]
  %v1361 = vld [vmem:[%s7 + $0x48] sm:$0xf]
  %v1362 = vld [vmem:[%s7 + $0x4c] sm:$0xf]
  %v1363 = vld [vmem:[%s7 + $0x50] sm:$0xf]
  %v1364 = vld [vmem:[%s7 + $0x54] sm:$0xf]
  %v1365 = vld [vmem:[%s7 + $0x58] sm:$0xf]
  %v1366 = vld [vmem:[%s7 + $0x5c] sm:$0xf]
  %v1367 = vld [vmem:[%s7 + $0x60] sm:$0xf]
  %v1368 = vld [vmem:[%s7 + $0x64] sm:$0xf]
  %v1369 = vld [vmem:[%s7 + $0x68] sm:$0xf]
  %v1370 = vld [vmem:[%s7 + $0x6c] sm:$0xf]
  %v1371 = vld [vmem:[%s7 + $0x70] sm:$0xf]
  %v1372 = vld [vmem:[%s7 + $0x74] sm:$0xf]
  %v1373 = vld [vmem:[%s7 + $0x78] sm:$0xf]
  %v1374 = vld [vmem:[%s7 + $0x7c] sm:$0xf]
  %v1375 = vld [vmem:[%s8] sm:$0x1]
  %v1377 = vlaneseq
  %v1378 = vshrl.u32 %v1377, 7
  %v1379 = vsub.s32 0, %v1378
  %v1380 = vrot.slane %v1375, %v1379
  %v1414 = vunpack.c.l.b16 %v1343
  %v1415 = vunpack.c.l.b16 %v1344
  %v1416 = vunpack.c.l.b16 %v1345
  %v1417 = vunpack.c.l.b16 %v1346
  %v1418 = vunpack.c.l.b16 %v1347
  %v1419 = vunpack.c.l.b16 %v1348
  %v1420 = vunpack.c.l.b16 %v1349
  %v1421 = vunpack.c.l.b16 %v1350
  %v1422 = vunpack.c.l.b16 %v1351
  %v1423 = vunpack.c.l.b16 %v1352
  %v1424 = vunpack.c.l.b16 %v1353
  %v1425 = vunpack.c.l.b16 %v1354
  %v1426 = vunpack.c.l.b16 %v1355
  %v1427 = vunpack.c.l.b16 %v1356
  %v1428 = vunpack.c.l.b16 %v1357
  %v1429 = vunpack.c.l.b16 %v1358
  %v1430 = vunpack.c.l.b16 %v1359
  %v1431 = vunpack.c.l.b16 %v1360
  %v1432 = vunpack.c.l.b16 %v1361
  %v1433 = vunpack.c.l.b16 %v1362
  %v1434 = vunpack.c.l.b16 %v1363
  %v1435 = vunpack.c.l.b16 %v1364
  %v1436 = vunpack.c.l.b16 %v1365
  %v1437 = vunpack.c.l.b16 %v1366
  %v1438 = vunpack.c.l.b16 %v1367
  %v1439 = vunpack.c.l.b16 %v1368
  %v1440 = vunpack.c.l.b16 %v1369
  %v1441 = vunpack.c.l.b16 %v1370
  %v1442 = vunpack.c.l.b16 %v1371
  %v1443 = vunpack.c.l.b16 %v1372
  %v1444 = vunpack.c.l.b16 %v1373
  %v1445 = vunpack.c.l.b16 %v1374
  %v1446 = vpack.c.b16 %v1415, %v1414
  %v1447 = vpack.c.b16 %v1417, %v1416
  %v1448 = vpack.c.b16 %v1419, %v1418
  %v1449 = vpack.c.b16 %v1421, %v1420
  %v1450 = vpack.c.b16 %v1423, %v1422
  %v1451 = vpack.c.b16 %v1425, %v1424
  %v1452 = vpack.c.b16 %v1427, %v1426
  %v1453 = vpack.c.b16 %v1429, %v1428
  %v1454 = vpack.c.b16 %v1431, %v1430
  %v1455 = vpack.c.b16 %v1433, %v1432
  %v1456 = vpack.c.b16 %v1435, %v1434
  %v1457 = vpack.c.b16 %v1437, %v1436
  %v1458 = vpack.c.b16 %v1439, %v1438
  %v1459 = vpack.c.b16 %v1441, %v1440
  %v1460 = vpack.c.b16 %v1443, %v1442
  %v1461 = vpack.c.b16 %v1445, %v1444
  %1478 = vmatprep.subr.bf16.mxu0 0
  %1479 = vmatpush1.bf16.msra.mxu0 %v1446
  %1480 = vmatprep.subr.bf16.mxu0 0
  %1481 = vmatpush1.bf16.msra.mxu0 %v1447
  %1482 = vmatprep.subr.bf16.mxu0 0
  %1483 = vmatpush1.bf16.msra.mxu0 %v1448
  %1484 = vmatprep.subr.bf16.mxu0 0
  %1485 = vmatpush1.bf16.msra.mxu0 %v1449
  %1486 = vmatprep.subr.bf16.mxu0 0
  %1487 = vmatpush1.bf16.msra.mxu0 %v1450
  %1488 = vmatprep.subr.bf16.mxu0 0
  %1489 = vmatpush1.bf16.msra.mxu0 %v1451
  %1490 = vmatprep.subr.bf16.mxu0 0
  %1491 = vmatpush1.bf16.msra.mxu0 %v1452
  %1492 = vmatprep.subr.bf16.mxu0 0
  %1493 = vmatpush1.bf16.msra.mxu0 %v1453
  %1494 = vmatprep.subr.bf16.mxu0 0
  %1495 = vmatpush1.bf16.msra.mxu0 %v1454
  %1496 = vmatprep.subr.bf16.mxu0 0
  %1497 = vmatpush1.bf16.msra.mxu0 %v1455
  %1498 = vmatprep.subr.bf16.mxu0 0
  %1499 = vmatpush1.bf16.msra.mxu0 %v1456
  %1500 = vmatprep.subr.bf16.mxu0 0
  %1501 = vmatpush1.bf16.msra.mxu0 %v1457
  %1502 = vmatprep.subr.bf16.mxu0 0
  %1503 = vmatpush1.bf16.msra.mxu0 %v1458
  %1504 = vmatprep.subr.bf16.mxu0 0
  %1505 = vmatpush1.bf16.msra.mxu0 %v1459
  %1506 = vmatprep.subr.bf16.mxu0 0
  %1507 = vmatpush1.bf16.msra.mxu0 %v1460
  %1508 = vmatprep.subr.bf16.mxu0 0
  %1509 = vmatpush1.bf16.msra.mxu0 %v1461
  %1510 = vmatprep.mubr.bf16.mxu0 %v983
  %1511 = vmatmul.mubr.bf16.gmra.mrb[0].mxu0 %v982
  %v1512 = vpop.f32.mrb[0].mxu0
  %v1513 = vadd.f32 %v1380, %v1512
  %v1514 = vpop.f32.mrb[0].mxu0
  %v1515 = vpop.f32.mrb[0].mxu0
  %v1516 = vadd.f32 %v1380, %v1515
  %v1517 = vpop.f32.mrb[0].mxu0
  %1518 = vmatprep.mubr.bf16.mxu0 %v985
  %1519 = vmatmul.mubr.bf16.gmra.mrb[0].mxu0 %v984
  %v1520 = vpop.f32.mrb[0].mxu0
  %v1521 = vadd.f32 %v1380, %v1520
  %v1522 = vpop.f32.mrb[0].mxu0
  %v1523 = vpop.f32.mrb[0].mxu0
  %v1524 = vadd.f32 %v1380, %v1523
  %v1525 = vpop.f32.mrb[0].mxu0
  %1526 = vmatprep.mubr.bf16.mxu0 %v987
  %1527 = vmatmul.mubr.bf16.gmra.mrb[0].mxu0 %v986
  %v1528 = vpop.f32.mrb[0].mxu0
  %v1529 = vadd.f32 %v1380, %v1528
  %v1530 = vpop.f32.mrb[0].mxu0
  %v1531 = vpop.f32.mrb[0].mxu0
  %v1532 = vadd.f32 %v1380, %v1531
  %v1533 = vpop.f32.mrb[0].mxu0
  %1534 = vmatprep.mubr.bf16.mxu0 %v989
  %1535 = vmatmul.mubr.bf16.gmra.mrb[0].mxu0 %v988
  %v1536 = vpop.f32.mrb[0].mxu0
  %v1537 = vadd.f32 %v1380, %v1536
  %v1538 = vpop.f32.mrb[0].mxu0
  %v1539 = vpop.f32.mrb[0].mxu0
  %v1540 = vadd.f32 %v1380, %v1539
  %v1541 = vpop.f32.mrb[0].mxu0
  %1542 = vmatprep.mubr.bf16.mxu0 %v991
  %1543 = vmatmul.mubr.bf16.gmra.mrb[0].mxu0 %v990
  %v1544 = vpop.f32.mrb[0].mxu0
  %v1545 = vadd.f32 %v1380, %v1544
  %v1546 = vpop.f32.mrb[0].mxu0
  %v1547 = vpop.f32.mrb[0].mxu0
  %v1548 = vadd.f32 %v1380, %v1547
  %v1549 = vpop.f32.mrb[0].mxu0
  %1550 = vmatprep.mubr.bf16.mxu0 %v993
  %1551 = vmatmul.mubr.bf16.gmra.mrb[0].mxu0 %v992
  %v1552 = vpop.f32.mrb[0].mxu0
  %v1553 = vadd.f32 %v1380, %v1552
  %v1554 = vpop.f32.mrb[0].mxu0
  %v1555 = vpop.f32.mrb[0].mxu0
  %v1556 = vadd.f32 %v1380, %v1555
  %v1557 = vpop.f32.mrb[0].mxu0
  %1558 = vmatprep.mubr.bf16.mxu0 %v995
  %1559 = vmatmul.mubr.bf16.gmra.mrb[0].mxu0 %v994
  %v1560 = vpop.f32.mrb[0].mxu0
  %v1561 = vadd.f32 %v1380, %v1560
  %v1562 = vpop.f32.mrb[0].mxu0
  %v1563 = vpop.f32.mrb[0].mxu0
  %v1564 = vadd.f32 %v1380, %v1563
  %v1565 = vpop.f32.mrb[0].mxu0
  %1566 = vmatprep.mubr.bf16.mxu0 %v997
  %1567 = vmatmul.mubr.bf16.gmra.mrb[0].mxu0 %v996
  %v1568 = vpop.f32.mrb[0].mxu0
  %v1569 = vadd.f32 %v1380, %v1568
  %v1570 = vpop.f32.mrb[0].mxu0
  %v1571 = vpop.f32.mrb[0].mxu0
  %v1572 = vadd.f32 %v1380, %v1571
  %v1573 = vpop.f32.mrb[0].mxu0
  %1574 = vmatprep.mubr.bf16.mxu0 %v999
  %1575 = vmatmul.mubr.bf16.gmra.mrb[0].mxu0 %v998
  %v1576 = vpop.f32.mrb[0].mxu0
  %v1577 = vadd.f32 %v1380, %v1576
  %v1578 = vpop.f32.mrb[0].mxu0
  %v1579 = vpop.f32.mrb[0].mxu0
  %v1580 = vadd.f32 %v1380, %v1579
  %v1581 = vpop.f32.mrb[0].mxu0
  %1582 = vmatprep.mubr.bf16.mxu0 %v1001
  %1583 = vmatmul.mubr.bf16.gmra.mrb[0].mxu0 %v1000
  %v1584 = vpop.f32.mrb[0].mxu0
  %v1585 = vadd.f32 %v1380, %v1584
  %v1586 = vpop.f32.mrb[0].mxu0
  %v1587 = vpop.f32.mrb[0].mxu0
  %v1588 = vadd.f32 %v1380, %v1587
  %v1589 = vpop.f32.mrb[0].mxu0
  %1590 = vmatprep.mubr.bf16.mxu0 %v1003
  %1591 = vmatmul.mubr.bf16.gmra.mrb[0].mxu0 %v1002
  %v1592 = vpop.f32.mrb[0].mxu0
  %v1593 = vadd.f32 %v1380, %v1592
  %v1594 = vpop.f32.mrb[0].mxu0
  %v1595 = vpop.f32.mrb[0].mxu0
  %v1596 = vadd.f32 %v1380, %v1595
  %v1597 = vpop.f32.mrb[0].mxu0
  %1598 = vmatprep.mubr.bf16.mxu0 %v1005
  %1599 = vmatmul.mubr.bf16.gmra.mrb[0].mxu0 %v1004
  %v1600 = vpop.f32.mrb[0].mxu0
  %v1601 = vadd.f32 %v1380, %v1600
  %v1602 = vpop.f32.mrb[0].mxu0
  %v1603 = vpop.f32.mrb[0].mxu0
  %v1604 = vadd.f32 %v1380, %v1603
  %v1605 = vpop.f32.mrb[0].mxu0
  %1606 = vmatprep.mubr.bf16.mxu0 %v1007
  %1607 = vmatmul.mubr.bf16.gmra.mrb[0].mxu0 %v1006
  %v1608 = vpop.f32.mrb[0].mxu0
  %v1609 = vadd.f32 %v1380, %v1608
  %v1610 = vpop.f32.mrb[0].mxu0
  %v1611 = vpop.f32.mrb[0].mxu0
  %v1612 = vadd.f32 %v1380, %v1611
  %v1613 = vpop.f32.mrb[0].mxu0
  %1614 = vmatprep.mubr.bf16.mxu0 %v1009
  %1615 = vmatmul.mubr.bf16.gmra.mrb[0].mxu0 %v1008
  %v1616 = vpop.f32.mrb[0].mxu0
  %v1617 = vadd.f32 %v1380, %v1616
  %v1618 = vpop.f32.mrb[0].mxu0
  %v1619 = vpop.f32.mrb[0].mxu0
  %v1620 = vadd.f32 %v1380, %v1619
  %v1621 = vpop.f32.mrb[0].mxu0
  %1622 = vmatprep.mubr.bf16.mxu0 %v1011
  %1623 = vmatmul.mubr.bf16.gmra.mrb[0].mxu0 %v1010
  %v1624 = vpop.f32.mrb[0].mxu0
  %v1625 = vadd.f32 %v1380, %v1624
  %v1626 = vpop.f32.mrb[0].mxu0
  %v1627 = vpop.f32.mrb[0].mxu0
  %v1628 = vadd.f32 %v1380, %v1627
  %v1629 = vpop.f32.mrb[0].mxu0
  %1630 = vmatprep.mubr.bf16.mxu0 %v1013
  %1631 = vmatmul.mubr.bf16.gmra.mrb[0].mxu0 %v1012
  %v1632 = vpop.f32.mrb[0].mxu0
  %v1633 = vadd.f32 %v1380, %v1632
  %v1634 = vpop.f32.mrb[0].mxu0
  %v1635 = vpop.f32.mrb[0].mxu0
  %v1636 = vadd.f32 %v1380, %v1635
  %v1637 = vpop.f32.mrb[0].mxu0
  %1638 = vdwg.mxu0
  %v1639 = vmax.f32 %v1513, -20.0
  %v1640 = vmax.f32 %v1516, -20.0
  %v1641 = vmax.f32 %v1521, -20.0
  %v1642 = vmax.f32 %v1524, -20.0
  %v1643 = vmax.f32 %v1529, -20.0
  %v1644 = vmax.f32 %v1532, -20.0
  %v1645 = vmax.f32 %v1537, -20.0
  %v1646 = vmax.f32 %v1540, -20.0
  %v1647 = vmax.f32 %v1545, -20.0
  %v1648 = vmax.f32 %v1548, -20.0
  %v1649 = vmax.f32 %v1553, -20.0
  %v1650 = vmax.f32 %v1556, -20.0
  %v1651 = vmax.f32 %v1561, -20.0
  %v1652 = vmax.f32 %v1564, -20.0
  %v1653 = vmax.f32 %v1569, -20.0
  %v1654 = vmax.f32 %v1572, -20.0
  %v1655 = vmax.f32 %v1577, -20.0
  %v1656 = vmax.f32 %v1580, -20.0
  %v1657 = vmax.f32 %v1585, -20.0
  %v1658 = vmax.f32 %v1588, -20.0
  %v1659 = vmax.f32 %v1593, -20.0
  %v1660 = vmax.f32 %v1596, -20.0
  %v1661 = vmax.f32 %v1601, -20.0
  %v1662 = vmax.f32 %v1604, -20.0
  %v1663 = vmax.f32 %v1609, -20.0
  %v1664 = vmax.f32 %v1612, -20.0
  %v1665 = vmax.f32 %v1617, -20.0
  %v1666 = vmax.f32 %v1620, -20.0
  %v1667 = vmax.f32 %v1625, -20.0
  %v1668 = vmax.f32 %v1628, -20.0
  %v1669 = vmax.f32 %v1633, -20.0
  %v1670 = vmax.f32 %v1636, -20.0
  %v1671 = vmin.f32 %v1639, 2.0
  %v1672 = vmin.f32 %v1640, 2.0
  %v1673 = vmin.f32 %v1641, 2.0
  %v1674 = vmin.f32 %v1642, 2.0
  %v1675 = vmin.f32 %v1643, 2.0
  %v1676 = vmin.f32 %v1644, 2.0
  %v1677 = vmin.f32 %v1645, 2.0
  %v1678 = vmin.f32 %v1646, 2.0
  %v1679 = vmin.f32 %v1647, 2.0
  %v1680 = vmin.f32 %v1648, 2.0
  %v1681 = vmin.f32 %v1649, 2.0
  %v1682 = vmin.f32 %v1650, 2.0
  %v1683 = vmin.f32 %v1651, 2.0
  %v1684 = vmin.f32 %v1652, 2.0
  %v1685 = vmin.f32 %v1653, 2.0
  %v1686 = vmin.f32 %v1654, 2.0
  %v1687 = vmin.f32 %v1655, 2.0
  %v1688 = vmin.f32 %v1656, 2.0
  %v1689 = vmin.f32 %v1657, 2.0
  %v1690 = vmin.f32 %v1658, 2.0
  %v1691 = vmin.f32 %v1659, 2.0
  %v1692 = vmin.f32 %v1660, 2.0
  %v1693 = vmin.f32 %v1661, 2.0
  %v1694 = vmin.f32 %v1662, 2.0
  %v1695 = vmin.f32 %v1663, 2.0
  %v1696 = vmin.f32 %v1664, 2.0
  %v1697 = vmin.f32 %v1665, 2.0
  %v1698 = vmin.f32 %v1666, 2.0
  %v1699 = vmin.f32 %v1667, 2.0
  %v1700 = vmin.f32 %v1668, 2.0
  %v1701 = vmin.f32 %v1669, 2.0
  %v1702 = vmin.f32 %v1670, 2.0
  %1703 = vst.msk [vmem:[%s10] sm:$0xff] %vm1310, %v1671
  %1704 = vst.msk [vmem:[%s10 + $0x8] sm:$0xff] %vm1310, %v1672
  %1705 = vst.msk [vmem:[%s10 + $0x10] sm:$0xff] %vm1310, %v1673
  %1706 = vst.msk [vmem:[%s10 + $0x18] sm:$0xff] %vm1310, %v1674
  %1707 = vst.msk [vmem:[%s10 + $0x20] sm:$0xff] %vm1310, %v1675
  %1708 = vst.msk [vmem:[%s10 + $0x28] sm:$0xff] %vm1310, %v1676
  %1709 = vst.msk [vmem:[%s10 + $0x30] sm:$0xff] %vm1310, %v1677
  %1710 = vst.msk [vmem:[%s10 + $0x38] sm:$0xff] %vm1310, %v1678
  %1711 = vst.msk [vmem:[%s10 + $0x40] sm:$0xff] %vm1310, %v1679
  %1712 = vst.msk [vmem:[%s10 + $0x48] sm:$0xff] %vm1310, %v1680
  %1713 = vst.msk [vmem:[%s10 + $0x50] sm:$0xff] %vm1310, %v1681
  %1714 = vst.msk [vmem:[%s10 + $0x58] sm:$0xff] %vm1310, %v1682
  %1715 = vst.msk [vmem:[%s10 + $0x60] sm:$0xff] %vm1310, %v1683
  %1716 = vst.msk [vmem:[%s10 + $0x68] sm:$0xff] %vm1310, %v1684
  %1717 = vst.msk [vmem:[%s10 + $0x70] sm:$0xff] %vm1310, %v1685
  %1718 = vst.msk [vmem:[%s10 + $0x78] sm:$0xff] %vm1310, %v1686
  %1719 = vst.msk [vmem:[%s10 + $0x80] sm:$0xff] %vm1310, %v1687
  %1720 = vst.msk [vmem:[%s10 + $0x88] sm:$0xff] %vm1310, %v1688
  %1721 = vst.msk [vmem:[%s10 + $0x90] sm:$0xff] %vm1310, %v1689
  %1722 = vst.msk [vmem:[%s10 + $0x98] sm:$0xff] %vm1310, %v1690
  %1723 = vst.msk [vmem:[%s10 + $0xa0] sm:$0xff] %vm1310, %v1691
  %1724 = vst.msk [vmem:[%s10 + $0xa8] sm:$0xff] %vm1310, %v1692
  %1725 = vst.msk [vmem:[%s10 + $0xb0] sm:$0xff] %vm1310, %v1693
  %1726 = vst.msk [vmem:[%s10 + $0xb8] sm:$0xff] %vm1310, %v1694
  %1727 = vst.msk [vmem:[%s10 + $0xc0] sm:$0xff] %vm1310, %v1695
  %1728 = vst.msk [vmem:[%s10 + $0xc8] sm:$0xff] %vm1310, %v1696
  %1729 = vst.msk [vmem:[%s10 + $0xd0] sm:$0xff] %vm1310, %v1697
  %1730 = vst.msk [vmem:[%s10 + $0xd8] sm:$0xff] %vm1310, %v1698
  %1731 = vst.msk [vmem:[%s10 + $0xe0] sm:$0xff] %vm1310, %v1699
  %1732 = vst.msk [vmem:[%s10 + $0xe8] sm:$0xff] %vm1310, %v1700
  %1733 = vst.msk [vmem:[%s10 + $0xf0] sm:$0xff] %vm1310, %v1701
  %1734 = vst.msk [vmem:[%s10 + $0xf8] sm:$0xff] %vm1310, %v1702
  // Predicated region
  $region38: #{tpu_custom_call.1} parent=0 // pred_check
    _
  $region39: #{tpu_custom_call.1} parent=0 // pred_check_branch
    %1736 = sbr.rel (0) target = $region41
  $region40: #{tpu_custom_call.1} parent=0 // pred_region
    _
  $region41: #{tpu_custom_call.1} parent=0 // pred_fallthru
    _
  // Predicated region
  $region42: #{tpu_custom_call.1} parent=0 // pred_check
    _
  $region43: #{tpu_custom_call.1} parent=0 // pred_check_branch
    %1738 = sbr.rel (0) target = $region45
  $region44: #{tpu_custom_call.1} parent=0 // pred_region
    _
  $region45: #{tpu_custom_call.1} parent=0 // pred_fallthru
    _
  // Predicated region
  $region46: #{tpu_custom_call.1} parent=0 // pred_check
    _
  $region47: #{tpu_custom_call.1} parent=0 // pred_check_branch
    %1740 = sbr.rel (0) target = $region49
  $region48: #{tpu_custom_call.1} parent=0 // pred_region
    _
  $region49: #{tpu_custom_call.1} parent=0 // pred_fallthru
    _
  // Predicated region
  $region50: #{tpu_custom_call.1} parent=0 // pred_check
    _
  $region51: #{tpu_custom_call.1} parent=0 // pred_check_branch
    %1742 = sbr.rel (0) target = $region53
  $region52: #{tpu_custom_call.1} parent=0 // pred_region
    _
  $region53: #{tpu_custom_call.1} parent=0 // pred_fallthru
    _

</llo_original>
